<compile_context>
chip_gen: v7x
topology: tpu7x:2x2x1
jax: 0.10.0
libtpu: 0.0.40
codegen_flags: <defaults>
</compile_context>

<pallas_src>
import functools

import jax
import jax.numpy as jnp
from jax.experimental import pallas as pl
from jax.experimental.pallas import tpu as pltpu


CD_DEPTH = 5


def _rbm_kernel(v_ref, w_ref, wt_ref, thr_h_ref, thr_v_ref, out_ref):
    """Full CD_DEPTH Gibbs chain for one batch tile.

    v_ref     : (TB, NV) f32    initial visible sample (binary 0/1)
    w_ref     : (NV, NH) bf16   weights        (used for h -> v : h @ W)
    wt_ref    : (NH, NV) bf16   W.T, precomputed (used for v -> h : v @ W.T)
    thr_h_ref : (CD, TB, NH) f32   logit(u_h) - h_bias
    thr_v_ref : (CD, TB, NV) f32   logit(u_v) - v_bias
    out_ref   : (TB, NV) f32
    """
    W = w_ref[...]                               # bf16, resident across the chain
    Wt = wt_ref[...]                             # bf16, no in-kernel transpose
    v = v_ref[...].astype(jnp.bfloat16)          # binary {0,1}: exact in bf16

    for t in range(CD_DEPTH):                    # chain is inherently serial; unrolled
        # ---- v_to_h: F.linear(v, W, h_bias) = v @ W.T + h_bias ----
        # sigmoid(x + h_bias) > u  <=>  x > logit(u) - h_bias  (== thr_h[t])
        h_lin = jnp.dot(v, Wt, preferred_element_type=jnp.float32)
        h = (h_lin > thr_h_ref[t]).astype(jnp.bfloat16)

        # ---- h_to_v: F.linear(h, W.T, v_bias) = h @ W + v_bias ----
        v_lin = jnp.dot(h, W, preferred_element_type=jnp.float32)
        v = (v_lin > thr_v_ref[t]).astype(jnp.bfloat16)

    out_ref[...] = v.astype(out_ref.dtype)


@functools.partial(jax.jit, static_argnames=("batch_tile",))
def rbm_forward(v, w_bf16, wt_bf16, thr_h, thr_v, *, batch_tile=128):
    """Run the CD_DEPTH-step Gibbs chain.

    v:       (B, NV) f32 binary visible input
    w_bf16:  (NV, NH) bf16
    wt_bf16: (NH, NV) bf16   (== W.T)
    thr_h:   (CD_DEPTH, B, NH) f32  = logit(u_h) - h_bias
    thr_v:   (CD_DEPTH, B, NV) f32  = logit(u_v) - v_bias
    """
    B, NV = v.shape
    NH = w_bf16.shape[1]
    CD = thr_h.shape[0]
    assert B % batch_tile == 0, "batch must be a multiple of batch_tile"

    grid_spec = pl.GridSpec(
        grid=(B // batch_tile,),
        in_specs=[
            pl.BlockSpec((batch_tile, NV), lambda i: (i, 0)),
            pl.BlockSpec((NV, NH), lambda i: (0, 0)),        # same block each step -> stays resident
            pl.BlockSpec((NH, NV), lambda i: (0, 0)),
            pl.BlockSpec((CD, batch_tile, NH), lambda i: (0, i, 0)),
            pl.BlockSpec((CD, batch_tile, NV), lambda i: (0, i, 0)),
        ],
        out_specs=pl.BlockSpec((batch_tile, NV), lambda i: (i, 0)),
    )

    return pl.pallas_call(
        _rbm_kernel,
        grid_spec=grid_spec,
        out_shape=jax.ShapeDtypeStruct((B, NV), jnp.float32),
        compiler_params=pltpu.CompilerParams(
            dimension_semantics=("parallel",),   # batch tiles independent -> 2 TCs on v7x
        ),
    )(v, w_bf16, wt_bf16, thr_h, thr_v)


def prepare_rbm_inputs(W, v_bias, h_bias, u_h, u_v):
    """Fold sigmoid + bias + uniform-compare into per-step logit thresholds and
    precompute bf16 W / W.T, so neither a transpose nor a transcendental runs
    inside the serial in-kernel Gibbs chain."""
    def logit(u):
        # u == 0 -> -inf: x > -inf is always True, matching sigmoid(x) > 0.
        return jnp.log(u) - jnp.log1p(-u)

    thr_h = (logit(u_h) - h_bias[None, None, :]).astype(jnp.float32)
    thr_v = (logit(u_v) - v_bias[None, None, :]).astype(jnp.float32)
    w_bf16 = W.astype(jnp.bfloat16)
    wt_bf16 = jnp.transpose(W).astype(jnp.bfloat16)
    return w_bf16, wt_bf16, thr_h, thr_v


if __name__ == "__main__":
    # RBM(n_visible, n_hidden, lr, CD_depth=5): forward only runs when
    # n_visible == n_hidden (see note above), so use 128 for both.
    n_visible = 128
    n_hidden = 128
    batch = 256          # >= 128 rows per tile so every matmul fills the MXU M dim
    batch_tile = 128

    key = jax.random.PRNGKey(0)
    k_w, k_v, k_uh, k_uv = jax.random.split(key, 4)

    # Deterministic parameter init mirroring __init__:
    #   W = randn(n_visible, n_hidden) * 0.01; biases = zeros
    W = jax.random.normal(k_w, (n_visible, n_hidden), dtype=jnp.float32) * 0.01
    v_bias = jnp.zeros((n_visible,), dtype=jnp.float32)
    h_bias = jnp.zeros((n_hidden,), dtype=jnp.float32)

    # Binary visible input.
    v0 = (jax.random.uniform(k_v, (batch, n_visible)) > 0.5).astype(jnp.float32)

    # Pre-drawn uniforms standing in for torch.rand inside sample_from_p
    # (deterministic stand-in for the module's stochastic sampling).
    u_h = jax.random.uniform(k_uh, (CD_DEPTH, batch, n_hidden), dtype=jnp.float32)
    u_v = jax.random.uniform(k_uv, (CD_DEPTH, batch, n_visible), dtype=jnp.float32)

    w_bf16, wt_bf16, thr_h, thr_v = prepare_rbm_inputs(W, v_bias, h_bias, u_h, u_v)

    out = rbm_forward(v0, w_bf16, wt_bf16, thr_h, thr_v, batch_tile=batch_tile)
    out = jax.block_until_ready(out)

    # Pure-JAX reference using the identical math path (same bf16 operands, same
    # f32 accumulation, same precomputed thresholds) for a sanity check.
    def ref(v):
        v = v.astype(jnp.bfloat16)
        for t in range(CD_DEPTH):
            h_lin = jnp.dot(v, wt_bf16, preferred_element_type=jnp.float32)
            h = (h_lin > thr_h[t]).astype(jnp.bfloat16)
            v_lin = jnp.dot(h, w_bf16, preferred_element_type=jnp.float32)
            v = (v_lin > thr_v[t]).astype(jnp.bfloat16)
        return v.astype(jnp.float32)

    expected = jax.block_until_ready(jax.jit(ref)(v0))

    assert out.shape == (batch, n_visible)
    assert bool(jnp.all((out == 0.0) | (out == 1.0))), "output is not binary"
    # Outputs are hard-thresholded samples; normally the Pallas dot and the XLA
    # reference dot are bit-identical, but allow a tiny flip fraction in case
    # MXU accumulation order differs between the two lowerings.
    mismatch = float(jnp.mean(jnp.abs(out - expected)))
    assert mismatch <= 0.02, f"kernel output mismatch fraction {mismatch}"

    print("KERNEL_OK")
</pallas_src>

<mosaic_0001>
module attributes {stable_mosaic.version = 11 : i64} {
  func.func @_rbm_kernel(%arg0: i32, %arg1: memref<128x128xf32, #tpu.memory_space<vmem>>, %arg2: memref<128x128xbf16, #tpu.memory_space<vmem>>, %arg3: memref<128x128xbf16, #tpu.memory_space<vmem>>, %arg4: memref<5x128x128xf32, #tpu.memory_space<vmem>>, %arg5: memref<5x128x128xf32, #tpu.memory_space<vmem>>, %arg6: memref<128x128xf32, #tpu.memory_space<vmem>>) attributes {dimension_semantics = [#tpu.dimension_semantics<parallel>], iteration_bounds = array<i64: 2>, scalar_prefetch = 0 : i64, scratch_operands = 0 : i64, tpu.core_type = #tpu.core_type<tc>, window_params = [{transform_indices = @transform_0, window_bounds = array<i64: 128, 128>}, {pipeline_mode = #tpu.pipeline_mode<synchronous>, transform_indices = @transform_1, window_bounds = array<i64: 128, 128>}, {pipeline_mode = #tpu.pipeline_mode<synchronous>, transform_indices = @transform_2, window_bounds = array<i64: 128, 128>}, {transform_indices = @transform_3, window_bounds = array<i64: 5, 128, 128>}, {transform_indices = @transform_4, window_bounds = array<i64: 5, 128, 128>}, {transform_indices = @transform_5, window_bounds = array<i64: 128, 128>}]} {
    %c0 = arith.constant 0 : index
    %c0_0 = arith.constant 0 : index
    %0 = vector.load %arg2[%c0, %c0_0] : memref<128x128xbf16, #tpu.memory_space<vmem>>, vector<128x128xbf16>
    %c0_1 = arith.constant 0 : index
    %c0_2 = arith.constant 0 : index
    %1 = vector.load %arg3[%c0_1, %c0_2] : memref<128x128xbf16, #tpu.memory_space<vmem>>, vector<128x128xbf16>
    %c0_3 = arith.constant 0 : index
    %c0_4 = arith.constant 0 : index
    %2 = vector.load %arg1[%c0_3, %c0_4] : memref<128x128xf32, #tpu.memory_space<vmem>>, vector<128x128xf32>
    %3 = arith.truncf %2 : vector<128x128xf32> to vector<128x128xbf16>
    %cst = arith.constant dense<0.000000e+00> : vector<128x128xf32>
    %4 = tpu.matmul %3, %1, %cst {dimension_numbers = #tpu.dot_dimension_numbers<[1], [0], [0], [1], [0, 0, 1, 1], [], []>} : vector<128x128xbf16>, vector<128x128xbf16>, vector<128x128xf32> -> vector<128x128xf32>
    %c0_5 = arith.constant 0 : index
    %c0_6 = arith.constant 0 : index
    %c0_7 = arith.constant 0 : index
    %5 = vector.load %arg4[%c0_5, %c0_6, %c0_7] : memref<5x128x128xf32, #tpu.memory_space<vmem>>, vector<1x128x128xf32>
    %6 = vector.shape_cast %5 : vector<1x128x128xf32> to vector<128x128xf32>
    %7 = arith.cmpf ogt, %4, %6 : vector<128x128xf32>
    %8 = arith.extui %7 : vector<128x128xi1> to vector<128x128xi32>
    %9 = arith.sitofp %8 : vector<128x128xi32> to vector<128x128xf32>
    %10 = arith.truncf %9 : vector<128x128xf32> to vector<128x128xbf16>
    %cst_8 = arith.constant dense<0.000000e+00> : vector<128x128xf32>
    %11 = tpu.matmul %10, %0, %cst_8 {dimension_numbers = #tpu.dot_dimension_numbers<[1], [0], [0], [1], [0, 0, 1, 1], [], []>} : vector<128x128xbf16>, vector<128x128xbf16>, vector<128x128xf32> -> vector<128x128xf32>
    %c0_9 = arith.constant 0 : index
    %c0_10 = arith.constant 0 : index
    %c0_11 = arith.constant 0 : index
    %12 = vector.load %arg5[%c0_9, %c0_10, %c0_11] : memref<5x128x128xf32, #tpu.memory_space<vmem>>, vector<1x128x128xf32>
    %13 = vector.shape_cast %12 : vector<1x128x128xf32> to vector<128x128xf32>
    %14 = arith.cmpf ogt, %11, %13 : vector<128x128xf32>
    %15 = arith.extui %14 : vector<128x128xi1> to vector<128x128xi32>
    %16 = arith.sitofp %15 : vector<128x128xi32> to vector<128x128xf32>
    %17 = arith.truncf %16 : vector<128x128xf32> to vector<128x128xbf16>
    %cst_12 = arith.constant dense<0.000000e+00> : vector<128x128xf32>
    %18 = tpu.matmul %17, %1, %cst_12 {dimension_numbers = #tpu.dot_dimension_numbers<[1], [0], [0], [1], [0, 0, 1, 1], [], []>} : vector<128x128xbf16>, vector<128x128xbf16>, vector<128x128xf32> -> vector<128x128xf32>
    %c1 = arith.constant 1 : index
    %c0_13 = arith.constant 0 : index
    %c0_14 = arith.constant 0 : index
    %19 = vector.load %arg4[%c1, %c0_13, %c0_14] : memref<5x128x128xf32, #tpu.memory_space<vmem>>, vector<1x128x128xf32>
    %20 = vector.shape_cast %19 : vector<1x128x128xf32> to vector<128x128xf32>
    %21 = arith.cmpf ogt, %18, %20 : vector<128x128xf32>
    %22 = arith.extui %21 : vector<128x128xi1> to vector<128x128xi32>
    %23 = arith.sitofp %22 : vector<128x128xi32> to vector<128x128xf32>
    %24 = arith.truncf %23 : vector<128x128xf32> to vector<128x128xbf16>
    %cst_15 = arith.constant dense<0.000000e+00> : vector<128x128xf32>
    %25 = tpu.matmul %24, %0, %cst_15 {dimension_numbers = #tpu.dot_dimension_numbers<[1], [0], [0], [1], [0, 0, 1, 1], [], []>} : vector<128x128xbf16>, vector<128x128xbf16>, vector<128x128xf32> -> vector<128x128xf32>
    %c1_16 = arith.constant 1 : index
    %c0_17 = arith.constant 0 : index
    %c0_18 = arith.constant 0 : index
    %26 = vector.load %arg5[%c1_16, %c0_17, %c0_18] : memref<5x128x128xf32, #tpu.memory_space<vmem>>, vector<1x128x128xf32>
    %27 = vector.shape_cast %26 : vector<1x128x128xf32> to vector<128x128xf32>
    %28 = arith.cmpf ogt, %25, %27 : vector<128x128xf32>
    %29 = arith.extui %28 : vector<128x128xi1> to vector<128x128xi32>
    %30 = arith.sitofp %29 : vector<128x128xi32> to vector<128x128xf32>
    %31 = arith.truncf %30 : vector<128x128xf32> to vector<128x128xbf16>
    %cst_19 = arith.constant dense<0.000000e+00> : vector<128x128xf32>
    %32 = tpu.matmul %31, %1, %cst_19 {dimension_numbers = #tpu.dot_dimension_numbers<[1], [0], [0], [1], [0, 0, 1, 1], [], []>} : vector<128x128xbf16>, vector<128x128xbf16>, vector<128x128xf32> -> vector<128x128xf32>
    %c2 = arith.constant 2 : index
    %c0_20 = arith.constant 0 : index
    %c0_21 = arith.constant 0 : index
    %33 = vector.load %arg4[%c2, %c0_20, %c0_21] : memref<5x128x128xf32, #tpu.memory_space<vmem>>, vector<1x128x128xf32>
    %34 = vector.shape_cast %33 : vector<1x128x128xf32> to vector<128x128xf32>
    %35 = arith.cmpf ogt, %32, %34 : vector<128x128xf32>
    %36 = arith.extui %35 : vector<128x128xi1> to vector<128x128xi32>
    %37 = arith.sitofp %36 : vector<128x128xi32> to vector<128x128xf32>
    %38 = arith.truncf %37 : vector<128x128xf32> to vector<128x128xbf16>
    %cst_22 = arith.constant dense<0.000000e+00> : vector<128x128xf32>
    %39 = tpu.matmul %38, %0, %cst_22 {dimension_numbers = #tpu.dot_dimension_numbers<[1], [0], [0], [1], [0, 0, 1, 1], [], []>} : vector<128x128xbf16>, vector<128x128xbf16>, vector<128x128xf32> -> vector<128x128xf32>
    %c2_23 = arith.constant 2 : index
    %c0_24 = arith.constant 0 : index
    %c0_25 = arith.constant 0 : index
    %40 = vector.load %arg5[%c2_23, %c0_24, %c0_25] : memref<5x128x128xf32, #tpu.memory_space<vmem>>, vector<1x128x128xf32>
    %41 = vector.shape_cast %40 : vector<1x128x128xf32> to vector<128x128xf32>
    %42 = arith.cmpf ogt, %39, %41 : vector<128x128xf32>
    %43 = arith.extui %42 : vector<128x128xi1> to vector<128x128xi32>
    %44 = arith.sitofp %43 : vector<128x128xi32> to vector<128x128xf32>
    %45 = arith.truncf %44 : vector<128x128xf32> to vector<128x128xbf16>
    %cst_26 = arith.constant dense<0.000000e+00> : vector<128x128xf32>
    %46 = tpu.matmul %45, %1, %cst_26 {dimension_numbers = #tpu.dot_dimension_numbers<[1], [0], [0], [1], [0, 0, 1, 1], [], []>} : vector<128x128xbf16>, vector<128x128xbf16>, vector<128x128xf32> -> vector<128x128xf32>
    %c3 = arith.constant 3 : index
    %c0_27 = arith.constant 0 : index
    %c0_28 = arith.constant 0 : index
    %47 = vector.load %arg4[%c3, %c0_27, %c0_28] : memref<5x128x128xf32, #tpu.memory_space<vmem>>, vector<1x128x128xf32>
    %48 = vector.shape_cast %47 : vector<1x128x128xf32> to vector<128x128xf32>
    %49 = arith.cmpf ogt, %46, %48 : vector<128x128xf32>
    %50 = arith.extui %49 : vector<128x128xi1> to vector<128x128xi32>
    %51 = arith.sitofp %50 : vector<128x128xi32> to vector<128x128xf32>
    %52 = arith.truncf %51 : vector<128x128xf32> to vector<128x128xbf16>
    %cst_29 = arith.constant dense<0.000000e+00> : vector<128x128xf32>
    %53 = tpu.matmul %52, %0, %cst_29 {dimension_numbers = #tpu.dot_dimension_numbers<[1], [0], [0], [1], [0, 0, 1, 1], [], []>} : vector<128x128xbf16>, vector<128x128xbf16>, vector<128x128xf32> -> vector<128x128xf32>
    %c3_30 = arith.constant 3 : index
    %c0_31 = arith.constant 0 : index
    %c0_32 = arith.constant 0 : index
    %54 = vector.load %arg5[%c3_30, %c0_31, %c0_32] : memref<5x128x128xf32, #tpu.memory_space<vmem>>, vector<1x128x128xf32>
    %55 = vector.shape_cast %54 : vector<1x128x128xf32> to vector<128x128xf32>
    %56 = arith.cmpf ogt, %53, %55 : vector<128x128xf32>
    %57 = arith.extui %56 : vector<128x128xi1> to vector<128x128xi32>
    %58 = arith.sitofp %57 : vector<128x128xi32> to vector<128x128xf32>
    %59 = arith.truncf %58 : vector<128x128xf32> to vector<128x128xbf16>
    %cst_33 = arith.constant dense<0.000000e+00> : vector<128x128xf32>
    %60 = tpu.matmul %59, %1, %cst_33 {dimension_numbers = #tpu.dot_dimension_numbers<[1], [0], [0], [1], [0, 0, 1, 1], [], []>} : vector<128x128xbf16>, vector<128x128xbf16>, vector<128x128xf32> -> vector<128x128xf32>
    %c4 = arith.constant 4 : index
    %c0_34 = arith.constant 0 : index
    %c0_35 = arith.constant 0 : index
    %61 = vector.load %arg4[%c4, %c0_34, %c0_35] : memref<5x128x128xf32, #tpu.memory_space<vmem>>, vector<1x128x128xf32>
    %62 = vector.shape_cast %61 : vector<1x128x128xf32> to vector<128x128xf32>
    %63 = arith.cmpf ogt, %60, %62 : vector<128x128xf32>
    %64 = arith.extui %63 : vector<128x128xi1> to vector<128x128xi32>
    %65 = arith.sitofp %64 : vector<128x128xi32> to vector<128x128xf32>
    %66 = arith.truncf %65 : vector<128x128xf32> to vector<128x128xbf16>
    %cst_36 = arith.constant dense<0.000000e+00> : vector<128x128xf32>
    %67 = tpu.matmul %66, %0, %cst_36 {dimension_numbers = #tpu.dot_dimension_numbers<[1], [0], [0], [1], [0, 0, 1, 1], [], []>} : vector<128x128xbf16>, vector<128x128xbf16>, vector<128x128xf32> -> vector<128x128xf32>
    %c4_37 = arith.constant 4 : index
    %c0_38 = arith.constant 0 : index
    %c0_39 = arith.constant 0 : index
    %68 = vector.load %arg5[%c4_37, %c0_38, %c0_39] : memref<5x128x128xf32, #tpu.memory_space<vmem>>, vector<1x128x128xf32>
    %69 = vector.shape_cast %68 : vector<1x128x128xf32> to vector<128x128xf32>
    %70 = arith.cmpf ogt, %67, %69 : vector<128x128xf32>
    %71 = arith.extui %70 : vector<128x128xi1> to vector<128x128xi32>
    %72 = arith.sitofp %71 : vector<128x128xi32> to vector<128x128xf32>
    %73 = arith.truncf %72 : vector<128x128xf32> to vector<128x128xbf16>
    %74 = arith.extf %73 : vector<128x128xbf16> to vector<128x128xf32>
    %c0_40 = arith.constant 0 : index
    %c0_41 = arith.constant 0 : index
    %75 = vector.load %arg6[%c0_40, %c0_41] : memref<128x128xf32, #tpu.memory_space<vmem>>, vector<128x128xf32>
    tpu.vector_store %arg6[%c0_40, %c0_41], %74 {strides = array<i32>} : memref<128x128xf32, #tpu.memory_space<vmem>>, vector<128x128xf32>,
    return
  }
  func.func @transform_0(%arg0: i32) -> (i32, i32) {
    %c0_i32 = arith.constant 0 : i32
    %c0_i32_0 = arith.constant 0 : i32
    return %arg0, %c0_i32 : i32, i32
  }
  func.func @transform_1(%arg0: i32) -> (i32, i32) {
    %c0_i32 = arith.constant 0 : i32
    %c0_i32_0 = arith.constant 0 : i32
    %c0_i32_1 = arith.constant 0 : i32
    return %c0_i32, %c0_i32_0 : i32, i32
  }
  func.func @transform_2(%arg0: i32) -> (i32, i32) {
    %c0_i32 = arith.constant 0 : i32
    %c0_i32_0 = arith.constant 0 : i32
    %c0_i32_1 = arith.constant 0 : i32
    return %c0_i32, %c0_i32_0 : i32, i32
  }
  func.func @transform_3(%arg0: i32) -> (i32, i32, i32) {
    %c0_i32 = arith.constant 0 : i32
    %c0_i32_0 = arith.constant 0 : i32
    %c0_i32_1 = arith.constant 0 : i32
    return %c0_i32, %arg0, %c0_i32_0 : i32, i32, i32
  }
  func.func @transform_4(%arg0: i32) -> (i32, i32, i32) {
    %c0_i32 = arith.constant 0 : i32
    %c0_i32_0 = arith.constant 0 : i32
    %c0_i32_1 = arith.constant 0 : i32
    return %c0_i32, %arg0, %c0_i32_0 : i32, i32, i32
  }
  func.func @transform_5(%arg0: i32) -> (i32, i32) {
    %c0_i32 = arith.constant 0 : i32
    %c0_i32_0 = arith.constant 0 : i32
    return %arg0, %c0_i32 : i32, i32
  }
}

</mosaic_0001>

<llo_original>
// kernel: rbm_forward.1
$region0: #{rbm_forward.1}
  #allocation0 [shape = 'u32[]', space=smem, size = 0x4, offset = 0x4, fixed_abs, tag = 'smem constant byte address 0x4 - core index']
  #allocation1 [shape = 'u32[144,128]{1,0:T(1,128)}', space=vmem, size = 0x12000, scoped, tag = 'internal scratch']
  #allocation12 [shape = 's32[]', space=sflag, size = 0x4, offset = 0, fixed_abs, tag = 'sflag constant byte address 0x0 - dummy sync flag']
  #allocation14 [shape = 's32[]', space=sflag, size = 0x4, offset = 0, fixed_abs, tag = 'sflag constant byte address 0x0 - dummy sync flag']
  %s0 = inlined_call_operand.hbm [shape: f32[256,128], index: 0, kind: input, shape index: {}]
  %s1 = inlined_call_operand.hbm [shape: bf16[128,128], index: 1, kind: input, shape index: {}]
  %s2 = inlined_call_operand.hbm [shape: bf16[128,128], index: 2, kind: input, shape index: {}]
  %s3 = inlined_call_operand.hbm [shape: f32[5,256,128], index: 3, kind: input, shape index: {}]
  %s4 = inlined_call_operand.hbm [shape: f32[5,256,128], index: 4, kind: input, shape index: {}]
  %s5 = inlined_call_operand.hbm [shape: f32[256,128], index: 5, kind: output, shape index: {}]
  %s6 = sld [smem:[#allocation0]]
  $region73: #{rbm_forward.1} parent=0
    _
  %s8 = ssub.s32 1, %s6
  %s9 = scalar_select 0, %s8, %s6
  $region1: #{rbm_forward.1} parent=0
    #allocation2 [shape = 'u8[131072]{0}', space=vmem, size = 0x20000, scoped, tag = 'input window, operand 0']
    #allocation3 [shape = 's32[2]{0}', space=sflag, size = 0x8, scoped, tag = 'scoped memory for rbm_forward.1']
    #allocation4 [shape = 's32[2]{0}', space=sflag, size = 0x8, scoped, tag = 'scoped memory for rbm_forward.1']
    #allocation5 [shape = 'u8[32768]{0}', space=vmem, size = 0x8000, scoped, tag = 'input window, operand 1, single buffered']
    #allocation6 [shape = 's32[1]{0}', space=sflag, size = 0x4, scoped, tag = 'scoped memory for rbm_forward.1']
    #allocation7 [shape = 'u8[32768]{0}', space=vmem, size = 0x8000, scoped, tag = 'input window, operand 2, single buffered']
    #allocation8 [shape = 'u8[655360]{0}', space=vmem, size = 0xa0000, scoped, tag = 'input window, operand 3']
    #allocation9 [shape = 's32[2]{0}', space=sflag, size = 0x8, scoped, tag = 'scoped memory for rbm_forward.1']
    #allocation10 [shape = 'u8[655360]{0}', space=vmem, size = 0xa0000, scoped, tag = 'input window, operand 4']
    #allocation11 [shape = 'u8[131072]{0}', space=vmem, size = 0x20000, scoped, tag = 'output window, operand 0']
    %10 = vsyncpa [#allocation3], 0
    %s11 = scalar_lea.sflag [#allocation3], 1
    %12 = vsyncpa %s11, 0
    %13 = vsyncpa [#allocation6], 0
    %14 = vsyncpa [#allocation9], 0
    %s15 = scalar_lea.sflag [#allocation9], 1
    %16 = vsyncpa %s15, 0
    %17 = vsyncpa [#allocation4], 0
    %s18 = scalar_lea.sflag [#allocation4], 1
    %19 = vsyncpa %s18, 0
    loop: start=0, step=1, limit=4
    $region2: #{rbm_forward.1} parent=1 // loop_pre_header
      _
    $region3: #{rbm_forward.1} parent=1 // loop_header
      %s21 = sphi 0, %s25
      %p22 = scmp.ge.s32.totalorder %s21, 4
      %s31 = sphi 0, %s33
      %s34 = sphi 0, %s31
      %s35 = sphi 0, %s34
      %s51 = sphi 0, %s35
      %s55 = sphi 0, %s55
      %s57 = sphi 0, %s55
      %s58 = sphi 0, %s57
      %s72 = sphi 0, %s58
      %s76 = sphi 0, %s76
      %s78 = sphi 0, %s76
      %s79 = sphi 0, %s78
      %s93 = sphi 0, %s79
      %s99 = sphi 0, %s101
      %s102 = sphi 0, %s99
      %s103 = sphi 0, %s102
      %s119 = sphi 0, %s103
      %s125 = sphi 0, %s127
      %s128 = sphi 0, %s125
      %s129 = sphi 0, %s128
      %s145 = sphi 0, %s129
      %s151 = sphi 0, %s153
      %s154 = sphi 0, %s151
      %s155 = sphi 0, %s154
      %s171 = sphi 0, %s155
    $region4: #{rbm_forward.1} parent=1 // loop_header_branch
      %24 = sbr.rel (%p22) target = $region8
    $region5: #{rbm_forward.1} parent=1 // loop_body
      %s26 = ssub.s32 %s21, 1
      %s27 = ssub.s32 %s21, 2
      %s28 = sadd.s32 %s21, 1
      %s29 = ssub.s32 %s21, %s28
      %p30 = scmp.eq.s32.totalorder %s29, 0
      %s32 = sadd.s32 %s31, 1
      %s33 = scalar_select %p30, %s31, %s32
      %p36 = pneg %p30
      %p37 = scmp.eq.s32.totalorder %s21, 1
      %p38 = por %p36, %p37
      %p39 = scmp.ne.s32.totalorder %s31, %s34
      %p40 = scmp.eq.s32.totalorder %s21, 0
      %p41 = por %p39, %p40
      %p42 = scmp.ne.s32.totalorder %s31, %s34
      %p43 = scmp.eq.s32.totalorder %s26, 1
      %p44 = por %p42, %p43
      %p45 = scmp.ne.s32.totalorder %s34, %s35
      %p46 = scmp.eq.s32.totalorder %s26, 0
      %p47 = por %p45, %p46
      %p48 = scmp.ne.s32.totalorder %s34, %s35
      %p49 = scmp.eq.s32.totalorder %s27, 1
      %p50 = por %p48, %p49
      %p52 = scmp.ne.s32.totalorder %s35, %s51
      %p53 = scmp.eq.s32.totalorder %s27, 0
      %p54 = por %p52, %p53
      %s56 = sadd.s32 %s55, 1
      %p59 = scmp.eq.s32.totalorder %s21, 1
      %p60 = scmp.ne.s32.totalorder %s55, %s57
      %p61 = scmp.eq.s32.totalorder %s21, 0
      %p62 = por %p60, %p61
      %p63 = scmp.ne.s32.totalorder %s55, %s57
      %p64 = scmp.eq.s32.totalorder %s26, 1
      %p65 = por %p63, %p64
      %p66 = scmp.ne.s32.totalorder %s57, %s58
      %p67 = scmp.eq.s32.totalorder %s26, 0
      %p68 = por %p66, %p67
      %p69 = scmp.ne.s32.totalorder %s57, %s58
      %p70 = scmp.eq.s32.totalorder %s27, 1
      %p71 = por %p69, %p70
      %p73 = scmp.ne.s32.totalorder %s58, %s72
      %p74 = scmp.eq.s32.totalorder %s27, 0
      %p75 = por %p73, %p74
      %s77 = sadd.s32 %s76, 1
      %p80 = scmp.eq.s32.totalorder %s21, 1
      %p81 = scmp.ne.s32.totalorder %s76, %s78
      %p82 = scmp.eq.s32.totalorder %s21, 0
      %p83 = por %p81, %p82
      %p84 = scmp.ne.s32.totalorder %s76, %s78
      %p85 = scmp.eq.s32.totalorder %s26, 1
      %p86 = por %p84, %p85
      %p87 = scmp.ne.s32.totalorder %s78, %s79
      %p88 = scmp.eq.s32.totalorder %s26, 0
      %p89 = por %p87, %p88
      %p90 = scmp.ne.s32.totalorder %s78, %s79
      %p91 = scmp.eq.s32.totalorder %s27, 1
      %p92 = por %p90, %p91
      %p94 = scmp.ne.s32.totalorder %s79, %s93
      %p95 = scmp.eq.s32.totalorder %s27, 0
      %p96 = por %p94, %p95
      %s97 = ssub.s32 %s21, %s28
      %p98 = scmp.eq.s32.totalorder %s97, 0
      %s100 = sadd.s32 %s99, 1
      %s101 = scalar_select %p98, %s99, %s100
      %p104 = pneg %p98
      %p105 = scmp.eq.s32.totalorder %s21, 1
      %p106 = por %p104, %p105
      %p107 = scmp.ne.s32.totalorder %s99, %s102
      %p108 = scmp.eq.s32.totalorder %s21, 0
      %p109 = por %p107, %p108
      %p110 = scmp.ne.s32.totalorder %s99, %s102
      %p111 = scmp.eq.s32.totalorder %s26, 1
      %p112 = por %p110, %p111
      %p113 = scmp.ne.s32.totalorder %s102, %s103
      %p114 = scmp.eq.s32.totalorder %s26, 0
      %p115 = por %p113, %p114
      %p116 = scmp.ne.s32.totalorder %s102, %s103
      %p117 = scmp.eq.s32.totalorder %s27, 1
      %p118 = por %p116, %p117
      %p120 = scmp.ne.s32.totalorder %s103, %s119
      %p121 = scmp.eq.s32.totalorder %s27, 0
      %p122 = por %p120, %p121
      %s123 = ssub.s32 %s21, %s28
      %p124 = scmp.eq.s32.totalorder %s123, 0
      %s126 = sadd.s32 %s125, 1
      %s127 = scalar_select %p124, %s125, %s126
      %p130 = pneg %p124
      %p131 = scmp.eq.s32.totalorder %s21, 1
      %p132 = por %p130, %p131
      %p133 = scmp.ne.s32.totalorder %s125, %s128
      %p134 = scmp.eq.s32.totalorder %s21, 0
      %p135 = por %p133, %p134
      %p136 = scmp.ne.s32.totalorder %s125, %s128
      %p137 = scmp.eq.s32.totalorder %s26, 1
      %p138 = por %p136, %p137
      %p139 = scmp.ne.s32.totalorder %s128, %s129
      %p140 = scmp.eq.s32.totalorder %s26, 0
      %p141 = por %p139, %p140
      %p142 = scmp.ne.s32.totalorder %s128, %s129
      %p143 = scmp.eq.s32.totalorder %s27, 1
      %p144 = por %p142, %p143
      %p146 = scmp.ne.s32.totalorder %s129, %s145
      %p147 = scmp.eq.s32.totalorder %s27, 0
      %p148 = por %p146, %p147
      %s149 = ssub.s32 %s21, %s28
      %p150 = scmp.eq.s32.totalorder %s149, 0
      %s152 = sadd.s32 %s151, 1
      %s153 = scalar_select %p150, %s151, %s152
      %p156 = pneg %p150
      %p157 = scmp.eq.s32.totalorder %s21, 1
      %p158 = por %p156, %p157
      %p159 = scmp.ne.s32.totalorder %s151, %s154
      %p160 = scmp.eq.s32.totalorder %s21, 0
      %p161 = por %p159, %p160
      %p162 = scmp.ne.s32.totalorder %s151, %s154
      %p163 = scmp.eq.s32.totalorder %s26, 1
      %p164 = por %p162, %p163
      %p165 = scmp.ne.s32.totalorder %s154, %s155
      %p166 = scmp.eq.s32.totalorder %s26, 0
      %p167 = por %p165, %p166
      %p168 = scmp.ne.s32.totalorder %s154, %s155
      %p169 = scmp.eq.s32.totalorder %s27, 1
      %p170 = por %p168, %p169
      %p172 = scmp.ne.s32.totalorder %s155, %s171
      %p173 = scmp.eq.s32.totalorder %s27, 0
      %p174 = por %p172, %p173
      %p175 = scmp.le.s32.totalorder 1, %s21
      %p176 = scmp.lt.s32.totalorder %s21, 3
      %p177 = pnand %p175, %p176
      %p178 = pneg %p177
      // Predicated region
      $region9: #{rbm_forward.1} parent=5 // pred_check
        _
      $region10: #{rbm_forward.1} parent=5 // pred_check_branch
        %180 = sbr.rel (%p177) target = $region12
      $region11: #{rbm_forward.1} parent=5 // pred_region
        %s181 = ssub.s32 %s21, 1
        // Predicated region
        $region13: #{rbm_forward.1} parent=11 // pred_check
          %p182 = pneg %p68
        $region14: #{rbm_forward.1} parent=11 // pred_check_branch
          %184 = sbr.rel (%p182) target = $region16
        $region15: #{rbm_forward.1} parent=11 // pred_region
          %s186 = ssub.s32 1024, 1024
          %187 = vsyncadd [#allocation6], %s186
          %s188 = sshll.u32 [#allocation5], 4
          %s189 = int_to_ptr.vmem [resolvable:$true] %s188
          %194 = dma.hbm_to_vmem [thread:$0]  %s1, 1024, %s189, [#allocation6], 64, 64, 4
        $region16: #{rbm_forward.1} parent=11 // pred_fallthru
          _
        // Predicated region
        $region17: #{rbm_forward.1} parent=11 // pred_check
          %p195 = pneg %p89
        $region18: #{rbm_forward.1} parent=11 // pred_check_branch
          %197 = sbr.rel (%p195) target = $region20
        $region19: #{rbm_forward.1} parent=11 // pred_region
          %s199 = ssub.s32 1024, 1024
          %200 = vsyncadd [#allocation6], %s199
          %s201 = sshll.u32 [#allocation7], 4
          %s202 = int_to_ptr.vmem [resolvable:$true] %s201
          %207 = dma.hbm_to_vmem [thread:$0]  %s2, 1024, %s202, [#allocation6], 64, 64, 4
        $region20: #{rbm_forward.1} parent=11 // pred_fallthru
          _
      $region12: #{rbm_forward.1} parent=5 // pred_fallthru
        _
      %p208 = scmp.lt.s32.totalorder %s21, 2
      // Predicated region
      $region21: #{rbm_forward.1} parent=5 // pred_check
        %p209 = pneg %p208
      $region22: #{rbm_forward.1} parent=5 // pred_check_branch
        %211 = sbr.rel (%p209) target = $region24
      $region23: #{rbm_forward.1} parent=5 // pred_region
        // Predicated region
        $region25: #{rbm_forward.1} parent=23 // pred_check
          %p212 = pneg %p41
        $region26: #{rbm_forward.1} parent=23 // pred_check_branch
          %214 = sbr.rel (%p212) target = $region28
        $region27: #{rbm_forward.1} parent=23 // pred_region
          %s215 = sand.u32 %s31, 1
          %s216 = scalar_lea.sflag [#allocation3], %s215
          %s217 = sand.u32 %s31, 1
          %s218 = smul.addr %s217, 128
          %s219 = scalar_lea.vmem [#allocation2], %s218
          %s220 = smul.u32 16, %s21
          %s222 = ssub.s32 2048, 2048
          %223 = vsyncadd %s216, %s222
          %s224 = smul.addr %s220, 128
          %s225 = scalar_lea.hbm %s0, %s224
          %s226 = sshll.u32 %s219, 4
          %s227 = int_to_ptr.vmem [resolvable:$true] %s226
          %232 = dma.hbm_to_vmem [thread:$0]  %s225, 2048, %s227, %s216, 128, 128, 8
        $region28: #{rbm_forward.1} parent=23 // pred_fallthru
          _
        // Predicated region
        $region29: #{rbm_forward.1} parent=23 // pred_check
          %p233 = pneg %p109
        $region30: #{rbm_forward.1} parent=23 // pred_check_branch
          %235 = sbr.rel (%p233) target = $region32
        $region31: #{rbm_forward.1} parent=23 // pred_region
          #allocation13 [shape = 'u32[6]{0}', space=smem, size = 0x18, scoped, tag = 'DMA stride descriptor']
          %s236 = sand.u32 %s21, 1
          %s237 = scalar_lea.sflag [#allocation9], %s236
          %s238 = sand.u32 %s99, 1
          %s239 = smul.addr %s238, 640
          %s240 = scalar_lea.vmem [#allocation8], %s239
          %s241 = smul.u32 16, %s21
          %s243 = ssub.s32 10240, 10240
          %244 = vsyncadd %s237, %s243
          %s245 = smul.addr %s241, 128
          %s246 = scalar_lea.hbm %s3, %s245
          %s248 = sshll.u32 1, 14
          %s249 = sxor.u32 4294967295, %s248
          %s251 = sld [smem:[#allocation0]]
          %s252 = sadd.s32 2, %s251
          %s254 = sshll.u32 7, 26
          %s255 = sxor.u32 4294967295, %s254
          %s256 = sand.u32 0, %s255
          %s257 = sshll.u32 %s252, 26
          %s258 = sor.u32 %s256, %s257
          %s259 = sshll.u32 %s240, 4
          %s260 = int_to_ptr.vmem [resolvable:$true] %s259
          %266 = sst [smem:[#allocation13]] 4096
          %s267 = scalar_lea.smem [#allocation13], 1
          %268 = sst [smem:[%s267]] 2048
          %s269 = scalar_lea.smem [#allocation13], 2
          %270 = sst [smem:[%s269]] 16
          %s271 = scalar_lea.smem [#allocation13], 3
          %272 = sst [smem:[%s271]] 128
          %s273 = scalar_lea.smem [#allocation13], 4
          %274 = sst [smem:[%s273]] 128
          %s275 = scalar_lea.smem [#allocation13], 5
          %276 = sst [smem:[%s275]] 8
          %278 = dma.general %s246, 10240, %s260, %s237, [#allocation12], [#allocation13], %s258, 0
        $region32: #{rbm_forward.1} parent=23 // pred_fallthru
          _
        // Predicated region
        $region33: #{rbm_forward.1} parent=23 // pred_check
          %p279 = pneg %p135
        $region34: #{rbm_forward.1} parent=23 // pred_check_branch
          %281 = sbr.rel (%p279) target = $region36
        $region35: #{rbm_forward.1} parent=23 // pred_region
          #allocation15 [shape = 'u32[6]{0}', space=smem, size = 0x18, scoped, tag = 'DMA stride descriptor']
          %s282 = sand.u32 %s21, 1
          %s283 = scalar_lea.sflag [#allocation9], %s282
          %s284 = sand.u32 %s125, 1
          %s285 = smul.addr %s284, 640
          %s286 = scalar_lea.vmem [#allocation10], %s285
          %s287 = smul.u32 16, %s21
          %s289 = ssub.s32 10240, 10240
          %290 = vsyncadd %s283, %s289
          %s291 = smul.addr %s287, 128
          %s292 = scalar_lea.hbm %s4, %s291
          %s294 = sshll.u32 1, 14
          %s295 = sxor.u32 4294967295, %s294
          %s297 = sld [smem:[#allocation0]]
          %s298 = sadd.s32 2, %s297
          %s300 = sshll.u32 7, 26
          %s301 = sxor.u32 4294967295, %s300
          %s302 = sand.u32 0, %s301
          %s303 = sshll.u32 %s298, 26
          %s304 = sor.u32 %s302, %s303
          %s305 = sshll.u32 %s286, 4
          %s306 = int_to_ptr.vmem [resolvable:$true] %s305
          %312 = sst [smem:[#allocation15]] 4096
          %s313 = scalar_lea.smem [#allocation15], 1
          %314 = sst [smem:[%s313]] 2048
          %s315 = scalar_lea.smem [#allocation15], 2
          %316 = sst [smem:[%s315]] 16
          %s317 = scalar_lea.smem [#allocation15], 3
          %318 = sst [smem:[%s317]] 128
          %s319 = scalar_lea.smem [#allocation15], 4
          %320 = sst [smem:[%s319]] 128
          %s321 = scalar_lea.smem [#allocation15], 5
          %322 = sst [smem:[%s321]] 8
          %324 = dma.general %s292, 10240, %s306, %s283, [#allocation14], [#allocation15], %s304, 0
        $region36: #{rbm_forward.1} parent=23 // pred_fallthru
          _
      $region24: #{rbm_forward.1} parent=5 // pred_fallthru
        _
      %p325 = scmp.le.s32.totalorder 1, %s21
      %p326 = scmp.lt.s32.totalorder %s21, 3
      %p327 = pnand %p325, %p326
      %p328 = pneg %p327
      // Predicated region
      $region37: #{rbm_forward.1} parent=5 // pred_check
        _
      $region38: #{rbm_forward.1} parent=5 // pred_check_branch
        %330 = sbr.rel (%p327) target = $region40
      $region39: #{rbm_forward.1} parent=5 // pred_region
        %s331 = ssub.s32 %s21, 1
        %s332 = sand.u32 %s34, 1
        %s333 = scalar_lea.sflag [#allocation3], %s332
        %s334 = sand.u32 %s34, 1
        %s335 = smul.addr %s334, 128
        %s336 = scalar_lea.vmem [#allocation2], %s335
        // Predicated region
        $region41: #{rbm_forward.1} parent=39 // pred_check
          %p337 = pneg %p47
        $region42: #{rbm_forward.1} parent=39 // pred_check_branch
          %339 = sbr.rel (%p337) target = $region44
        $region43: #{rbm_forward.1} parent=39 // pred_region
          %340 = dma.done %s333, 2048
        $region44: #{rbm_forward.1} parent=39 // pred_fallthru
          _
        // Predicated region
        $region45: #{rbm_forward.1} parent=39 // pred_check
          %p341 = pneg %p68
        $region46: #{rbm_forward.1} parent=39 // pred_check_branch
          %343 = sbr.rel (%p341) target = $region48
        $region47: #{rbm_forward.1} parent=39 // pred_region
          %344 = dma.done [#allocation6], 1024
        $region48: #{rbm_forward.1} parent=39 // pred_fallthru
          _
        // Predicated region
        $region49: #{rbm_forward.1} parent=39 // pred_check
          %p345 = pneg %p89
        $region50: #{rbm_forward.1} parent=39 // pred_check_branch
          %347 = sbr.rel (%p345) target = $region52
        $region51: #{rbm_forward.1} parent=39 // pred_region
          %348 = dma.done [#allocation6], 1024
        $region52: #{rbm_forward.1} parent=39 // pred_fallthru
          _
        %s349 = sand.u32 %s26, 1
        %s350 = scalar_lea.sflag [#allocation9], %s349
        %s351 = sand.u32 %s102, 1
        %s352 = smul.addr %s351, 640
        %s353 = scalar_lea.vmem [#allocation8], %s352
        // Predicated region
        $region53: #{rbm_forward.1} parent=39 // pred_check
          %p354 = pneg %p115
        $region54: #{rbm_forward.1} parent=39 // pred_check_branch
          %356 = sbr.rel (%p354) target = $region56
        $region55: #{rbm_forward.1} parent=39 // pred_region
          %357 = dma.done %s350, 10240
        $region56: #{rbm_forward.1} parent=39 // pred_fallthru
          _
        %s358 = sand.u32 %s26, 1
        %s359 = scalar_lea.sflag [#allocation9], %s358
        %s360 = sand.u32 %s128, 1
        %s361 = smul.addr %s360, 640
        %s362 = scalar_lea.vmem [#allocation10], %s361
        // Predicated region
        $region57: #{rbm_forward.1} parent=39 // pred_check
          %p363 = pneg %p141
        $region58: #{rbm_forward.1} parent=39 // pred_check_branch
          %365 = sbr.rel (%p363) target = $region60
        $region59: #{rbm_forward.1} parent=39 // pred_region
          %366 = dma.done %s359, 10240
        $region60: #{rbm_forward.1} parent=39 // pred_fallthru
          _
        %s367 = sand.u32 %s34, 1
        %s368 = scalar_lea.sflag [#allocation3], %s367
        %s369 = sand.u32 %s34, 1
        %s370 = smul.addr %s369, 128
        %s371 = scalar_lea.vmem [#allocation2], %s370
        %p372 = pneg %p47
        %p373 = pneg %p44
        %p374 = pneg %p68
        %p375 = pneg %p65
        %p376 = pneg %p89
        %p377 = pneg %p86
        %s378 = sand.u32 %s26, 1
        %s379 = scalar_lea.sflag [#allocation9], %s378
        %s380 = sand.u32 %s102, 1
        %s381 = smul.addr %s380, 640
        %s382 = scalar_lea.vmem [#allocation8], %s381
        %p383 = pneg %p115
        %p384 = pneg %p112
        %s385 = sand.u32 %s26, 1
        %s386 = scalar_lea.sflag [#allocation9], %s385
        %s387 = sand.u32 %s128, 1
        %s388 = smul.addr %s387, 640
        %s389 = scalar_lea.vmem [#allocation10], %s388
        %p390 = pneg %p141
        %p391 = pneg %p138
        %p392 = pneg %p167
        %p393 = pneg %p164
        %s394 = sand.u32 %s154, 1
        %s395 = scalar_lea.sflag [#allocation4], %s394
        %s396 = sand.u32 %s154, 1
        %s397 = smul.addr %s396, 128
        %s398 = scalar_lea.vmem [#allocation11], %s397
        %s399 = smul.u32 16, %s26
        %s400 = smul.u32 16, %s26
        %s401 = smul.u32 16, %s26
        %s402 = smul.u32 16, %s26
        %v404 = vld [vmem:[#allocation5] sm:$0xf]
        %v405 = vld [vmem:[#allocation5 + $0x4] sm:$0xf]
        %v406 = vld [vmem:[#allocation5 + $0x8] sm:$0xf]
        %v407 = vld [vmem:[#allocation5 + $0xc] sm:$0xf]
        %v408 = vld [vmem:[#allocation5 + $0x10] sm:$0xf]
        %v409 = vld [vmem:[#allocation5 + $0x14] sm:$0xf]
        %v410 = vld [vmem:[#allocation5 + $0x18] sm:$0xf]
        %v411 = vld [vmem:[#allocation5 + $0x1c] sm:$0xf]
        %v412 = vld [vmem:[#allocation5 + $0x20] sm:$0xf]
        %v413 = vld [vmem:[#allocation5 + $0x24] sm:$0xf]
        %v414 = vld [vmem:[#allocation5 + $0x28] sm:$0xf]
        %v415 = vld [vmem:[#allocation5 + $0x2c] sm:$0xf]
        %v416 = vld [vmem:[#allocation5 + $0x30] sm:$0xf]
        %v417 = vld [vmem:[#allocation5 + $0x34] sm:$0xf]
        %v418 = vld [vmem:[#allocation5 + $0x38] sm:$0xf]
        %v419 = vld [vmem:[#allocation5 + $0x3c] sm:$0xf]
        %v420 = vld [vmem:[#allocation7] sm:$0xf]
        %v421 = vld [vmem:[#allocation7 + $0x4] sm:$0xf]
        %v422 = vld [vmem:[#allocation7 + $0x8] sm:$0xf]
        %v423 = vld [vmem:[#allocation7 + $0xc] sm:$0xf]
        %v424 = vld [vmem:[#allocation7 + $0x10] sm:$0xf]
        %v425 = vld [vmem:[#allocation7 + $0x14] sm:$0xf]
        %v426 = vld [vmem:[#allocation7 + $0x18] sm:$0xf]
        %v427 = vld [vmem:[#allocation7 + $0x1c] sm:$0xf]
        %v428 = vld [vmem:[#allocation7 + $0x20] sm:$0xf]
        %v429 = vld [vmem:[#allocation7 + $0x24] sm:$0xf]
        %v430 = vld [vmem:[#allocation7 + $0x28] sm:$0xf]
        %v431 = vld [vmem:[#allocation7 + $0x2c] sm:$0xf]
        %v432 = vld [vmem:[#allocation7 + $0x30] sm:$0xf]
        %v433 = vld [vmem:[#allocation7 + $0x34] sm:$0xf]
        %v434 = vld [vmem:[#allocation7 + $0x38] sm:$0xf]
        %v435 = vld [vmem:[#allocation7 + $0x3c] sm:$0xf]
        %v436 = vld [vmem:[%s336] sm:$0xff]
        %v437 = vld [vmem:[%s336 + $0x8] sm:$0xff]
        %v438 = vld [vmem:[%s336 + $0x10] sm:$0xff]
        %v439 = vld [vmem:[%s336 + $0x18] sm:$0xff]
        %v440 = vld [vmem:[%s336 + $0x20] sm:$0xff]
        %v441 = vld [vmem:[%s336 + $0x28] sm:$0xff]
        %v442 = vld [vmem:[%s336 + $0x30] sm:$0xff]
        %v443 = vld [vmem:[%s336 + $0x38] sm:$0xff]
        %v444 = vld [vmem:[%s336 + $0x40] sm:$0xff]
        %v445 = vld [vmem:[%s336 + $0x48] sm:$0xff]
        %v446 = vld [vmem:[%s336 + $0x50] sm:$0xff]
        %v447 = vld [vmem:[%s336 + $0x58] sm:$0xff]
        %v448 = vld [vmem:[%s336 + $0x60] sm:$0xff]
        %v449 = vld [vmem:[%s336 + $0x68] sm:$0xff]
        %v450 = vld [vmem:[%s336 + $0x70] sm:$0xff]
        %v451 = vld [vmem:[%s336 + $0x78] sm:$0xff]
        %v452 = vpack.c.bf16 %v437, %v436
        %v453 = vpack.c.bf16 %v439, %v438
        %v454 = vpack.c.bf16 %v441, %v440
        %v455 = vpack.c.bf16 %v443, %v442
        %v456 = vpack.c.bf16 %v445, %v444
        %v457 = vpack.c.bf16 %v447, %v446
        %v458 = vpack.c.bf16 %v449, %v448
        %v459 = vpack.c.bf16 %v451, %v450
        %v476 = vunpack.c.l.b16 %v420
        %v477 = vunpack.c.l.b16 %v421
        %v478 = vunpack.c.l.b16 %v422
        %v479 = vunpack.c.l.b16 %v423
        %v480 = vunpack.c.l.b16 %v424
        %v481 = vunpack.c.l.b16 %v425
        %v482 = vunpack.c.l.b16 %v426
        %v483 = vunpack.c.l.b16 %v427
        %v484 = vunpack.c.l.b16 %v428
        %v485 = vunpack.c.l.b16 %v429
        %v486 = vunpack.c.l.b16 %v430
        %v487 = vunpack.c.l.b16 %v431
        %v488 = vunpack.c.l.b16 %v432
        %v489 = vunpack.c.l.b16 %v433
        %v490 = vunpack.c.l.b16 %v434
        %v491 = vunpack.c.l.b16 %v435
        %v492 = vpack.c.b16 %v477, %v476
        %v493 = vpack.c.b16 %v479, %v478
        %v494 = vpack.c.b16 %v481, %v480
        %v495 = vpack.c.b16 %v483, %v482
        %v496 = vpack.c.b16 %v485, %v484
        %v497 = vpack.c.b16 %v487, %v486
        %v498 = vpack.c.b16 %v489, %v488
        %v499 = vpack.c.b16 %v491, %v490
        %508 = vmatprep.subr.bf16.mxu0 0
        %509 = vmatpush1.bf16.msra.mxu0 %v492
        %510 = vmatprep.subr.bf16.mxu0 0
        %511 = vmatpush1.bf16.msra.mxu0 %v493
        %512 = vmatprep.subr.bf16.mxu0 0
        %513 = vmatpush1.bf16.msra.mxu0 %v494
        %514 = vmatprep.subr.bf16.mxu0 0
        %515 = vmatpush1.bf16.msra.mxu0 %v495
        %516 = vmatprep.subr.bf16.mxu0 0
        %517 = vmatpush1.bf16.msra.mxu0 %v496
        %518 = vmatprep.subr.bf16.mxu0 0
        %519 = vmatpush1.bf16.msra.mxu0 %v497
        %520 = vmatprep.subr.bf16.mxu0 0
        %521 = vmatpush1.bf16.msra.mxu0 %v498
        %522 = vmatprep.subr.bf16.mxu0 0
        %523 = vmatpush1.bf16.msra.mxu0 %v499
        %524 = vmatprep.subr.bf16.mxu0 0
        %525 = vmatpush1.bf16.msra.mxu0 0
        %526 = vmatprep.subr.bf16.mxu0 0
        %527 = vmatpush1.bf16.msra.mxu0 0
        %528 = vmatprep.subr.bf16.mxu0 0
        %529 = vmatpush1.bf16.msra.mxu0 0
        %530 = vmatprep.subr.bf16.mxu0 0
        %531 = vmatpush1.bf16.msra.mxu0 0
        %532 = vmatprep.subr.bf16.mxu0 0
        %533 = vmatpush1.bf16.msra.mxu0 0
        %534 = vmatprep.subr.bf16.mxu0 0
        %535 = vmatpush1.bf16.msra.mxu0 0
        %536 = vmatprep.subr.bf16.mxu0 0
        %537 = vmatpush1.bf16.msra.mxu0 0
        %538 = vmatprep.subr.bf16.mxu0 0
        %539 = vmatpush1.bf16.msra.mxu0 0
        %540 = vmatprep.mubr.bf16.mxu0 0
        %541 = vmatmul.mubr.bf16.gmra.mrb[0].mxu0 %v452
        %v542 = vpop.f32.mrb[0].mxu0
        %v543 = vadd.f32 0.0, %v542
        %v544 = vpop.f32.mrb[0].mxu0
        %v545 = vpop.f32.mrb[0].mxu0
        %v546 = vadd.f32 0.0, %v545
        %v547 = vpop.f32.mrb[0].mxu0
        %548 = vmatprep.mubr.bf16.mxu0 0
        %549 = vmatmul.mubr.bf16.gmra.mrb[0].mxu0 %v453
        %v550 = vpop.f32.mrb[0].mxu0
        %v551 = vadd.f32 0.0, %v550
        %v552 = vpop.f32.mrb[0].mxu0
        %v553 = vpop.f32.mrb[0].mxu0
        %v554 = vadd.f32 0.0, %v553
        %v555 = vpop.f32.mrb[0].mxu0
        %556 = vmatprep.mubr.bf16.mxu0 0
        %557 = vmatmul.mubr.bf16.gmra.mrb[0].mxu0 %v454
        %v558 = vpop.f32.mrb[0].mxu0
        %v559 = vadd.f32 0.0, %v558
        %v560 = vpop.f32.mrb[0].mxu0
        %v561 = vpop.f32.mrb[0].mxu0
        %v562 = vadd.f32 0.0, %v561
        %v563 = vpop.f32.mrb[0].mxu0
        %564 = vmatprep.mubr.bf16.mxu0 0
        %565 = vmatmul.mubr.bf16.gmra.mrb[0].mxu0 %v455
        %v566 = vpop.f32.mrb[0].mxu0
        %v567 = vadd.f32 0.0, %v566
        %v568 = vpop.f32.mrb[0].mxu0
        %v569 = vpop.f32.mrb[0].mxu0
        %v570 = vadd.f32 0.0, %v569
        %v571 = vpop.f32.mrb[0].mxu0
        %572 = vmatprep.mubr.bf16.mxu0 0
        %573 = vmatmul.mubr.bf16.gmra.mrb[0].mxu0 %v456
        %v574 = vpop.f32.mrb[0].mxu0
        %v575 = vadd.f32 0.0, %v574
        %v576 = vpop.f32.mrb[0].mxu0
        %v577 = vpop.f32.mrb[0].mxu0
        %v578 = vadd.f32 0.0, %v577
        %v579 = vpop.f32.mrb[0].mxu0
        %580 = vmatprep.mubr.bf16.mxu0 0
        %581 = vmatmul.mubr.bf16.gmra.mrb[0].mxu0 %v457
        %v582 = vpop.f32.mrb[0].mxu0
        %v583 = vadd.f32 0.0, %v582
        %v584 = vpop.f32.mrb[0].mxu0
        %v585 = vpop.f32.mrb[0].mxu0
        %v586 = vadd.f32 0.0, %v585
        %v587 = vpop.f32.mrb[0].mxu0
        %588 = vmatprep.mubr.bf16.mxu0 0
        %589 = vmatmul.mubr.bf16.gmra.mrb[0].mxu0 %v458
        %v590 = vpop.f32.mrb[0].mxu0
        %v591 = vadd.f32 0.0, %v590
        %v592 = vpop.f32.mrb[0].mxu0
        %v593 = vpop.f32.mrb[0].mxu0
        %v594 = vadd.f32 0.0, %v593
        %v595 = vpop.f32.mrb[0].mxu0
        %596 = vmatprep.mubr.bf16.mxu0 0
        %597 = vmatmul.mubr.bf16.gmra.mrb[0].mxu0 %v459
        %v598 = vpop.f32.mrb[0].mxu0
        %v599 = vadd.f32 0.0, %v598
        %v600 = vpop.f32.mrb[0].mxu0
        %v601 = vpop.f32.mrb[0].mxu0
        %v602 = vadd.f32 0.0, %v601
        %v603 = vpop.f32.mrb[0].mxu0
        %604 = vdwg.mxu0
        %v605 = vld [vmem:[%s353] sm:$0xff]
        %v606 = vld [vmem:[%s353 + $0x8] sm:$0xff]
        %v607 = vld [vmem:[%s353 + $0x10] sm:$0xff]
        %v608 = vld [vmem:[%s353 + $0x18] sm:$0xff]
        %v609 = vld [vmem:[%s353 + $0x20] sm:$0xff]
        %v610 = vld [vmem:[%s353 + $0x28] sm:$0xff]
        %v611 = vld [vmem:[%s353 + $0x30] sm:$0xff]
        %v612 = vld [vmem:[%s353 + $0x38] sm:$0xff]
        %v613 = vld [vmem:[%s353 + $0x40] sm:$0xff]
        %v614 = vld [vmem:[%s353 + $0x48] sm:$0xff]
        %v615 = vld [vmem:[%s353 + $0x50] sm:$0xff]
        %v616 = vld [vmem:[%s353 + $0x58] sm:$0xff]
        %v617 = vld [vmem:[%s353 + $0x60] sm:$0xff]
        %v618 = vld [vmem:[%s353 + $0x68] sm:$0xff]
        %v619 = vld [vmem:[%s353 + $0x70] sm:$0xff]
        %v620 = vld [vmem:[%s353 + $0x78] sm:$0xff]
        %vm621 = vcmp.gt.f32.partialorder %v543, %v605
        %vm622 = vcmp.gt.f32.partialorder %v546, %v606
        %vm623 = vcmp.gt.f32.partialorder %v551, %v607
        %vm624 = vcmp.gt.f32.partialorder %v554, %v608
        %vm625 = vcmp.gt.f32.partialorder %v559, %v609
        %vm626 = vcmp.gt.f32.partialorder %v562, %v610
        %vm627 = vcmp.gt.f32.partialorder %v567, %v611
        %vm628 = vcmp.gt.f32.partialorder %v570, %v612
        %vm629 = vcmp.gt.f32.partialorder %v575, %v613
        %vm630 = vcmp.gt.f32.partialorder %v578, %v614
        %vm631 = vcmp.gt.f32.partialorder %v583, %v615
        %vm632 = vcmp.gt.f32.partialorder %v586, %v616
        %vm633 = vcmp.gt.f32.partialorder %v591, %v617
        %vm634 = vcmp.gt.f32.partialorder %v594, %v618
        %vm635 = vcmp.gt.f32.partialorder %v599, %v619
        %vm636 = vcmp.gt.f32.partialorder %v602, %v620
        %v637 = vsel %vm621, 1, 0
        %v638 = vsel %vm622, 1, 0
        %v639 = vsel %vm623, 1, 0
        %v640 = vsel %vm624, 1, 0
        %v641 = vsel %vm625, 1, 0
        %v642 = vsel %vm626, 1, 0
        %v643 = vsel %vm627, 1, 0
        %v644 = vsel %vm628, 1, 0
        %v645 = vsel %vm629, 1, 0
        %v646 = vsel %vm630, 1, 0
        %v647 = vsel %vm631, 1, 0
        %v648 = vsel %vm632, 1, 0
        %v649 = vsel %vm633, 1, 0
        %v650 = vsel %vm634, 1, 0
        %v651 = vsel %vm635, 1, 0
        %v652 = vsel %vm636, 1, 0
        %v653 = vcvt.s32.f32 %v637
        %v654 = vcvt.s32.f32 %v638
        %v655 = vcvt.s32.f32 %v639
        %v656 = vcvt.s32.f32 %v640
        %v657 = vcvt.s32.f32 %v641
        %v658 = vcvt.s32.f32 %v642
        %v659 = vcvt.s32.f32 %v643
        %v660 = vcvt.s32.f32 %v644
        %v661 = vcvt.s32.f32 %v645
        %v662 = vcvt.s32.f32 %v646
        %v663 = vcvt.s32.f32 %v647
        %v664 = vcvt.s32.f32 %v648
        %v665 = vcvt.s32.f32 %v649
        %v666 = vcvt.s32.f32 %v650
        %v667 = vcvt.s32.f32 %v651
        %v668 = vcvt.s32.f32 %v652
        %v669 = vpack.c.bf16 %v654, %v653
        %v670 = vpack.c.bf16 %v656, %v655
        %v671 = vpack.c.bf16 %v658, %v657
        %v672 = vpack.c.bf16 %v660, %v659
        %v673 = vpack.c.bf16 %v662, %v661
        %v674 = vpack.c.bf16 %v664, %v663
        %v675 = vpack.c.bf16 %v666, %v665
        %v676 = vpack.c.bf16 %v668, %v667
        %v693 = vunpack.c.l.b16 %v404
        %v694 = vunpack.c.l.b16 %v405
        %v695 = vunpack.c.l.b16 %v406
        %v696 = vunpack.c.l.b16 %v407
        %v697 = vunpack.c.l.b16 %v408
        %v698 = vunpack.c.l.b16 %v409
        %v699 = vunpack.c.l.b16 %v410
        %v700 = vunpack.c.l.b16 %v411
        %v701 = vunpack.c.l.b16 %v412
        %v702 = vunpack.c.l.b16 %v413
        %v703 = vunpack.c.l.b16 %v414
        %v704 = vunpack.c.l.b16 %v415
        %v705 = vunpack.c.l.b16 %v416
        %v706 = vunpack.c.l.b16 %v417
        %v707 = vunpack.c.l.b16 %v418
        %v708 = vunpack.c.l.b16 %v419
        %v709 = vpack.c.b16 %v694, %v693
        %v710 = vpack.c.b16 %v696, %v695
        %v711 = vpack.c.b16 %v698, %v697
        %v712 = vpack.c.b16 %v700, %v699
        %v713 = vpack.c.b16 %v702, %v701
        %v714 = vpack.c.b16 %v704, %v703
        %v715 = vpack.c.b16 %v706, %v705
        %v716 = vpack.c.b16 %v708, %v707
        %725 = vmatprep.subr.bf16.mxu0 0
        %726 = vmatpush1.bf16.msra.mxu0 %v709
        %727 = vmatprep.subr.bf16.mxu0 0
        %728 = vmatpush1.bf16.msra.mxu0 %v710
        %729 = vmatprep.subr.bf16.mxu0 0
        %730 = vmatpush1.bf16.msra.mxu0 %v711
        %731 = vmatprep.subr.bf16.mxu0 0
        %732 = vmatpush1.bf16.msra.mxu0 %v712
        %733 = vmatprep.subr.bf16.mxu0 0
        %734 = vmatpush1.bf16.msra.mxu0 %v713
        %735 = vmatprep.subr.bf16.mxu0 0
        %736 = vmatpush1.bf16.msra.mxu0 %v714
        %737 = vmatprep.subr.bf16.mxu0 0
        %738 = vmatpush1.bf16.msra.mxu0 %v715
        %739 = vmatprep.subr.bf16.mxu0 0
        %740 = vmatpush1.bf16.msra.mxu0 %v716
        %741 = vmatprep.subr.bf16.mxu0 0
        %742 = vmatpush1.bf16.msra.mxu0 0
        %743 = vmatprep.subr.bf16.mxu0 0
        %744 = vmatpush1.bf16.msra.mxu0 0
        %745 = vmatprep.subr.bf16.mxu0 0
        %746 = vmatpush1.bf16.msra.mxu0 0
        %747 = vmatprep.subr.bf16.mxu0 0
        %748 = vmatpush1.bf16.msra.mxu0 0
        %749 = vmatprep.subr.bf16.mxu0 0
        %750 = vmatpush1.bf16.msra.mxu0 0
        %751 = vmatprep.subr.bf16.mxu0 0
        %752 = vmatpush1.bf16.msra.mxu0 0
        %753 = vmatprep.subr.bf16.mxu0 0
        %754 = vmatpush1.bf16.msra.mxu0 0
        %755 = vmatprep.subr.bf16.mxu0 0
        %756 = vmatpush1.bf16.msra.mxu0 0
        %757 = vmatprep.mubr.bf16.mxu0 0
        %758 = vmatmul.mubr.bf16.gmra.mrb[0].mxu0 %v669
        %v759 = vpop.f32.mrb[0].mxu0
        %v760 = vadd.f32 0.0, %v759
        %v761 = vpop.f32.mrb[0].mxu0
        %v762 = vpop.f32.mrb[0].mxu0
        %v763 = vadd.f32 0.0, %v762
        %v764 = vpop.f32.mrb[0].mxu0
        %765 = vmatprep.mubr.bf16.mxu0 0
        %766 = vmatmul.mubr.bf16.gmra.mrb[0].mxu0 %v670
        %v767 = vpop.f32.mrb[0].mxu0
        %v768 = vadd.f32 0.0, %v767
        %v769 = vpop.f32.mrb[0].mxu0
        %v770 = vpop.f32.mrb[0].mxu0
        %v771 = vadd.f32 0.0, %v770
        %v772 = vpop.f32.mrb[0].mxu0
        %773 = vmatprep.mubr.bf16.mxu0 0
        %774 = vmatmul.mubr.bf16.gmra.mrb[0].mxu0 %v671
        %v775 = vpop.f32.mrb[0].mxu0
        %v776 = vadd.f32 0.0, %v775
        %v777 = vpop.f32.mrb[0].mxu0
        %v778 = vpop.f32.mrb[0].mxu0
        %v779 = vadd.f32 0.0, %v778
        %v780 = vpop.f32.mrb[0].mxu0
        %781 = vmatprep.mubr.bf16.mxu0 0
        %782 = vmatmul.mubr.bf16.gmra.mrb[0].mxu0 %v672
        %v783 = vpop.f32.mrb[0].mxu0
        %v784 = vadd.f32 0.0, %v783
        %v785 = vpop.f32.mrb[0].mxu0
        %v786 = vpop.f32.mrb[0].mxu0
        %v787 = vadd.f32 0.0, %v786
        %v788 = vpop.f32.mrb[0].mxu0
        %789 = vmatprep.mubr.bf16.mxu0 0
        %790 = vmatmul.mubr.bf16.gmra.mrb[0].mxu0 %v673
        %v791 = vpop.f32.mrb[0].mxu0
        %v792 = vadd.f32 0.0, %v791
        %v793 = vpop.f32.mrb[0].mxu0
        %v794 = vpop.f32.mrb[0].mxu0
        %v795 = vadd.f32 0.0, %v794
        %v796 = vpop.f32.mrb[0].mxu0
        %797 = vmatprep.mubr.bf16.mxu0 0
        %798 = vmatmul.mubr.bf16.gmra.mrb[0].mxu0 %v674
        %v799 = vpop.f32.mrb[0].mxu0
        %v800 = vadd.f32 0.0, %v799
        %v801 = vpop.f32.mrb[0].mxu0
        %v802 = vpop.f32.mrb[0].mxu0
        %v803 = vadd.f32 0.0, %v802
        %v804 = vpop.f32.mrb[0].mxu0
        %805 = vmatprep.mubr.bf16.mxu0 0
        %806 = vmatmul.mubr.bf16.gmra.mrb[0].mxu0 %v675
        %v807 = vpop.f32.mrb[0].mxu0
        %v808 = vadd.f32 0.0, %v807
        %v809 = vpop.f32.mrb[0].mxu0
        %v810 = vpop.f32.mrb[0].mxu0
        %v811 = vadd.f32 0.0, %v810
        %v812 = vpop.f32.mrb[0].mxu0
        %813 = vmatprep.mubr.bf16.mxu0 0
        %814 = vmatmul.mubr.bf16.gmra.mrb[0].mxu0 %v676
        %v815 = vpop.f32.mrb[0].mxu0
        %v816 = vadd.f32 0.0, %v815
        %v817 = vpop.f32.mrb[0].mxu0
        %v818 = vpop.f32.mrb[0].mxu0
        %v819 = vadd.f32 0.0, %v818
        %v820 = vpop.f32.mrb[0].mxu0
        %821 = vdwg.mxu0
        %v822 = vld [vmem:[%s362] sm:$0xff]
        %v823 = vld [vmem:[%s362 + $0x8] sm:$0xff]
        %v824 = vld [vmem:[%s362 + $0x10] sm:$0xff]
        %v825 = vld [vmem:[%s362 + $0x18] sm:$0xff]
        %v826 = vld [vmem:[%s362 + $0x20] sm:$0xff]
        %v827 = vld [vmem:[%s362 + $0x28] sm:$0xff]
        %v828 = vld [vmem:[%s362 + $0x30] sm:$0xff]
        %v829 = vld [vmem:[%s362 + $0x38] sm:$0xff]
        %v830 = vld [vmem:[%s362 + $0x40] sm:$0xff]
        %v831 = vld [vmem:[%s362 + $0x48] sm:$0xff]
        %v832 = vld [vmem:[%s362 + $0x50] sm:$0xff]
        %v833 = vld [vmem:[%s362 + $0x58] sm:$0xff]
        %v834 = vld [vmem:[%s362 + $0x60] sm:$0xff]
        %v835 = vld [vmem:[%s362 + $0x68] sm:$0xff]
        %v836 = vld [vmem:[%s362 + $0x70] sm:$0xff]
        %v837 = vld [vmem:[%s362 + $0x78] sm:$0xff]
        %vm838 = vcmp.gt.f32.partialorder %v760, %v822
        %vm839 = vcmp.gt.f32.partialorder %v763, %v823
        %vm840 = vcmp.gt.f32.partialorder %v768, %v824
        %vm841 = vcmp.gt.f32.partialorder %v771, %v825
        %vm842 = vcmp.gt.f32.partialorder %v776, %v826
        %vm843 = vcmp.gt.f32.partialorder %v779, %v827
        %vm844 = vcmp.gt.f32.partialorder %v784, %v828
        %vm845 = vcmp.gt.f32.partialorder %v787, %v829
        %vm846 = vcmp.gt.f32.partialorder %v792, %v830
        %vm847 = vcmp.gt.f32.partialorder %v795, %v831
        %vm848 = vcmp.gt.f32.partialorder %v800, %v832
        %vm849 = vcmp.gt.f32.partialorder %v803, %v833
        %vm850 = vcmp.gt.f32.partialorder %v808, %v834
        %vm851 = vcmp.gt.f32.partialorder %v811, %v835
        %vm852 = vcmp.gt.f32.partialorder %v816, %v836
        %vm853 = vcmp.gt.f32.partialorder %v819, %v837
        %v854 = vsel %vm838, 1, 0
        %v855 = vsel %vm839, 1, 0
        %v856 = vsel %vm840, 1, 0
        %v857 = vsel %vm841, 1, 0
        %v858 = vsel %vm842, 1, 0
        %v859 = vsel %vm843, 1, 0
        %v860 = vsel %vm844, 1, 0
        %v861 = vsel %vm845, 1, 0
        %v862 = vsel %vm846, 1, 0
        %v863 = vsel %vm847, 1, 0
        %v864 = vsel %vm848, 1, 0
        %v865 = vsel %vm849, 1, 0
        %v866 = vsel %vm850, 1, 0
        %v867 = vsel %vm851, 1, 0
        %v868 = vsel %vm852, 1, 0
        %v869 = vsel %vm853, 1, 0
        %v870 = vcvt.s32.f32 %v854
        %v871 = vcvt.s32.f32 %v855
        %v872 = vcvt.s32.f32 %v856
        %v873 = vcvt.s32.f32 %v857
        %v874 = vcvt.s32.f32 %v858
        %v875 = vcvt.s32.f32 %v859
        %v876 = vcvt.s32.f32 %v860
        %v877 = vcvt.s32.f32 %v861
        %v878 = vcvt.s32.f32 %v862
        %v879 = vcvt.s32.f32 %v863
        %v880 = vcvt.s32.f32 %v864
        %v881 = vcvt.s32.f32 %v865
        %v882 = vcvt.s32.f32 %v866
        %v883 = vcvt.s32.f32 %v867
        %v884 = vcvt.s32.f32 %v868
        %v885 = vcvt.s32.f32 %v869
        %v886 = vpack.c.bf16 %v871, %v870
        %v887 = vpack.c.bf16 %v873, %v872
        %v888 = vpack.c.bf16 %v875, %v874
        %v889 = vpack.c.bf16 %v877, %v876
        %v890 = vpack.c.bf16 %v879, %v878
        %v891 = vpack.c.bf16 %v881, %v880
        %v892 = vpack.c.bf16 %v883, %v882
        %v893 = vpack.c.bf16 %v885, %v884
        %894 = vmatprep.subr.bf16.mxu0 0
        %895 = vmatpush1.bf16.msra.mxu0 %v492
        %896 = vmatprep.subr.bf16.mxu0 0
        %897 = vmatpush1.bf16.msra.mxu0 %v493
        %898 = vmatprep.subr.bf16.mxu0 0
        %899 = vmatpush1.bf16.msra.mxu0 %v494
        %900 = vmatprep.subr.bf16.mxu0 0
        %901 = vmatpush1.bf16.msra.mxu0 %v495
        %902 = vmatprep.subr.bf16.mxu0 0
        %903 = vmatpush1.bf16.msra.mxu0 %v496
        %904 = vmatprep.subr.bf16.mxu0 0
        %905 = vmatpush1.bf16.msra.mxu0 %v497
        %906 = vmatprep.subr.bf16.mxu0 0
        %907 = vmatpush1.bf16.msra.mxu0 %v498
        %908 = vmatprep.subr.bf16.mxu0 0
        %909 = vmatpush1.bf16.msra.mxu0 %v499
        %910 = vmatprep.subr.bf16.mxu0 0
        %911 = vmatpush1.bf16.msra.mxu0 0
        %912 = vmatprep.subr.bf16.mxu0 0
        %913 = vmatpush1.bf16.msra.mxu0 0
        %914 = vmatprep.subr.bf16.mxu0 0
        %915 = vmatpush1.bf16.msra.mxu0 0
        %916 = vmatprep.subr.bf16.mxu0 0
        %917 = vmatpush1.bf16.msra.mxu0 0
        %918 = vmatprep.subr.bf16.mxu0 0
        %919 = vmatpush1.bf16.msra.mxu0 0
        %920 = vmatprep.subr.bf16.mxu0 0
        %921 = vmatpush1.bf16.msra.mxu0 0
        %922 = vmatprep.subr.bf16.mxu0 0
        %923 = vmatpush1.bf16.msra.mxu0 0
        %924 = vmatprep.subr.bf16.mxu0 0
        %925 = vmatpush1.bf16.msra.mxu0 0
        %926 = vmatprep.mubr.bf16.mxu0 0
        %927 = vmatmul.mubr.bf16.gmra.mrb[0].mxu0 %v886
        %v928 = vpop.f32.mrb[0].mxu0
        %v929 = vadd.f32 0.0, %v928
        %v930 = vpop.f32.mrb[0].mxu0
        %v931 = vpop.f32.mrb[0].mxu0
        %v932 = vadd.f32 0.0, %v931
        %v933 = vpop.f32.mrb[0].mxu0
        %934 = vmatprep.mubr.bf16.mxu0 0
        %935 = vmatmul.mubr.bf16.gmra.mrb[0].mxu0 %v887
        %v936 = vpop.f32.mrb[0].mxu0
        %v937 = vadd.f32 0.0, %v936
        %v938 = vpop.f32.mrb[0].mxu0
        %v939 = vpop.f32.mrb[0].mxu0
        %v940 = vadd.f32 0.0, %v939
        %v941 = vpop.f32.mrb[0].mxu0
        %942 = vmatprep.mubr.bf16.mxu0 0
        %943 = vmatmul.mubr.bf16.gmra.mrb[0].mxu0 %v888
        %v944 = vpop.f32.mrb[0].mxu0
        %v945 = vadd.f32 0.0, %v944
        %v946 = vpop.f32.mrb[0].mxu0
        %v947 = vpop.f32.mrb[0].mxu0
        %v948 = vadd.f32 0.0, %v947
        %v949 = vpop.f32.mrb[0].mxu0
        %950 = vmatprep.mubr.bf16.mxu0 0
        %951 = vmatmul.mubr.bf16.gmra.mrb[0].mxu0 %v889
        %v952 = vpop.f32.mrb[0].mxu0
        %v953 = vadd.f32 0.0, %v952
        %v954 = vpop.f32.mrb[0].mxu0
        %v955 = vpop.f32.mrb[0].mxu0
        %v956 = vadd.f32 0.0, %v955
        %v957 = vpop.f32.mrb[0].mxu0
        %958 = vmatprep.mubr.bf16.mxu0 0
        %959 = vmatmul.mubr.bf16.gmra.mrb[0].mxu0 %v890
        %v960 = vpop.f32.mrb[0].mxu0
        %v961 = vadd.f32 0.0, %v960
        %v962 = vpop.f32.mrb[0].mxu0
        %v963 = vpop.f32.mrb[0].mxu0
        %v964 = vadd.f32 0.0, %v963
        %v965 = vpop.f32.mrb[0].mxu0
        %966 = vmatprep.mubr.bf16.mxu0 0
        %967 = vmatmul.mubr.bf16.gmra.mrb[0].mxu0 %v891
        %v968 = vpop.f32.mrb[0].mxu0
        %v969 = vadd.f32 0.0, %v968
        %v970 = vpop.f32.mrb[0].mxu0
        %v971 = vpop.f32.mrb[0].mxu0
        %v972 = vadd.f32 0.0, %v971
        %v973 = vpop.f32.mrb[0].mxu0
        %974 = vmatprep.mubr.bf16.mxu0 0
        %975 = vmatmul.mubr.bf16.gmra.mrb[0].mxu0 %v892
        %v976 = vpop.f32.mrb[0].mxu0
        %v977 = vadd.f32 0.0, %v976
        %v978 = vpop.f32.mrb[0].mxu0
        %v979 = vpop.f32.mrb[0].mxu0
        %v980 = vadd.f32 0.0, %v979
        %v981 = vpop.f32.mrb[0].mxu0
        %982 = vmatprep.mubr.bf16.mxu0 0
        %983 = vmatmul.mubr.bf16.gmra.mrb[0].mxu0 %v893
        %v984 = vpop.f32.mrb[0].mxu0
        %v985 = vadd.f32 0.0, %v984
        %v986 = vpop.f32.mrb[0].mxu0
        %v987 = vpop.f32.mrb[0].mxu0
        %v988 = vadd.f32 0.0, %v987
        %v989 = vpop.f32.mrb[0].mxu0
        %990 = vdwg.mxu0
        %s991 = scalar_lea.vmem %s353, 128 [#allocation8]
        %v992 = vld [vmem:[%s991] sm:$0xff]
        %v993 = vld [vmem:[%s991 + $0x8] sm:$0xff]
        %v994 = vld [vmem:[%s991 + $0x10] sm:$0xff]
        %v995 = vld [vmem:[%s991 + $0x18] sm:$0xff]
        %v996 = vld [vmem:[%s991 + $0x20] sm:$0xff]
        %v997 = vld [vmem:[%s991 + $0x28] sm:$0xff]
        %v998 = vld [vmem:[%s991 + $0x30] sm:$0xff]
        %v999 = vld [vmem:[%s991 + $0x38] sm:$0xff]
        %v1000 = vld [vmem:[%s991 + $0x40] sm:$0xff]
        %v1001 = vld [vmem:[%s991 + $0x48] sm:$0xff]
        %v1002 = vld [vmem:[%s991 + $0x50] sm:$0xff]
        %v1003 = vld [vmem:[%s991 + $0x58] sm:$0xff]
        %v1004 = vld [vmem:[%s991 + $0x60] sm:$0xff]
        %v1005 = vld [vmem:[%s991 + $0x68] sm:$0xff]
        %v1006 = vld [vmem:[%s991 + $0x70] sm:$0xff]
        %v1007 = vld [vmem:[%s991 + $0x78] sm:$0xff]
        %vm1008 = vcmp.gt.f32.partialorder %v929, %v992
        %vm1009 = vcmp.gt.f32.partialorder %v932, %v993
        %vm1010 = vcmp.gt.f32.partialorder %v937, %v994
        %vm1011 = vcmp.gt.f32.partialorder %v940, %v995
        %vm1012 = vcmp.gt.f32.partialorder %v945, %v996
        %vm1013 = vcmp.gt.f32.partialorder %v948, %v997
        %vm1014 = vcmp.gt.f32.partialorder %v953, %v998
        %vm1015 = vcmp.gt.f32.partialorder %v956, %v999
        %vm1016 = vcmp.gt.f32.partialorder %v961, %v1000
        %vm1017 = vcmp.gt.f32.partialorder %v964, %v1001
        %vm1018 = vcmp.gt.f32.partialorder %v969, %v1002
        %vm1019 = vcmp.gt.f32.partialorder %v972, %v1003
        %vm1020 = vcmp.gt.f32.partialorder %v977, %v1004
        %vm1021 = vcmp.gt.f32.partialorder %v980, %v1005
        %vm1022 = vcmp.gt.f32.partialorder %v985, %v1006
        %vm1023 = vcmp.gt.f32.partialorder %v988, %v1007
        %v1024 = vsel %vm1008, 1, 0
        %v1025 = vsel %vm1009, 1, 0
        %v1026 = vsel %vm1010, 1, 0
        %v1027 = vsel %vm1011, 1, 0
        %v1028 = vsel %vm1012, 1, 0
        %v1029 = vsel %vm1013, 1, 0
        %v1030 = vsel %vm1014, 1, 0
        %v1031 = vsel %vm1015, 1, 0
        %v1032 = vsel %vm1016, 1, 0
        %v1033 = vsel %vm1017, 1, 0
        %v1034 = vsel %vm1018, 1, 0
        %v1035 = vsel %vm1019, 1, 0
        %v1036 = vsel %vm1020, 1, 0
        %v1037 = vsel %vm1021, 1, 0
        %v1038 = vsel %vm1022, 1, 0
        %v1039 = vsel %vm1023, 1, 0
        %v1040 = vcvt.s32.f32 %v1024
        %v1041 = vcvt.s32.f32 %v1025
        %v1042 = vcvt.s32.f32 %v1026
        %v1043 = vcvt.s32.f32 %v1027
        %v1044 = vcvt.s32.f32 %v1028
        %v1045 = vcvt.s32.f32 %v1029
        %v1046 = vcvt.s32.f32 %v1030
        %v1047 = vcvt.s32.f32 %v1031
        %v1048 = vcvt.s32.f32 %v1032
        %v1049 = vcvt.s32.f32 %v1033
        %v1050 = vcvt.s32.f32 %v1034
        %v1051 = vcvt.s32.f32 %v1035
        %v1052 = vcvt.s32.f32 %v1036
        %v1053 = vcvt.s32.f32 %v1037
        %v1054 = vcvt.s32.f32 %v1038
        %v1055 = vcvt.s32.f32 %v1039
        %v1056 = vpack.c.bf16 %v1041, %v1040
        %v1057 = vpack.c.bf16 %v1043, %v1042
        %v1058 = vpack.c.bf16 %v1045, %v1044
        %v1059 = vpack.c.bf16 %v1047, %v1046
        %v1060 = vpack.c.bf16 %v1049, %v1048
        %v1061 = vpack.c.bf16 %v1051, %v1050
        %v1062 = vpack.c.bf16 %v1053, %v1052
        %v1063 = vpack.c.bf16 %v1055, %v1054
        %1064 = vmatprep.subr.bf16.mxu0 0
        %1065 = vmatpush1.bf16.msra.mxu0 %v709
        %1066 = vmatprep.subr.bf16.mxu0 0
        %1067 = vmatpush1.bf16.msra.mxu0 %v710
        %1068 = vmatprep.subr.bf16.mxu0 0
        %1069 = vmatpush1.bf16.msra.mxu0 %v711
        %1070 = vmatprep.subr.bf16.mxu0 0
        %1071 = vmatpush1.bf16.msra.mxu0 %v712
        %1072 = vmatprep.subr.bf16.mxu0 0
        %1073 = vmatpush1.bf16.msra.mxu0 %v713
        %1074 = vmatprep.subr.bf16.mxu0 0
        %1075 = vmatpush1.bf16.msra.mxu0 %v714
        %1076 = vmatprep.subr.bf16.mxu0 0
        %1077 = vmatpush1.bf16.msra.mxu0 %v715
        %1078 = vmatprep.subr.bf16.mxu0 0
        %1079 = vmatpush1.bf16.msra.mxu0 %v716
        %1080 = vmatprep.subr.bf16.mxu0 0
        %1081 = vmatpush1.bf16.msra.mxu0 0
        %1082 = vmatprep.subr.bf16.mxu0 0
        %1083 = vmatpush1.bf16.msra.mxu0 0
        %1084 = vmatprep.subr.bf16.mxu0 0
        %1085 = vmatpush1.bf16.msra.mxu0 0
        %1086 = vmatprep.subr.bf16.mxu0 0
        %1087 = vmatpush1.bf16.msra.mxu0 0
        %1088 = vmatprep.subr.bf16.mxu0 0
        %1089 = vmatpush1.bf16.msra.mxu0 0
        %1090 = vmatprep.subr.bf16.mxu0 0
        %1091 = vmatpush1.bf16.msra.mxu0 0
        %1092 = vmatprep.subr.bf16.mxu0 0
        %1093 = vmatpush1.bf16.msra.mxu0 0
        %1094 = vmatprep.subr.bf16.mxu0 0
        %1095 = vmatpush1.bf16.msra.mxu0 0
        %1096 = vmatprep.mubr.bf16.mxu0 0
        %1097 = vmatmul.mubr.bf16.gmra.mrb[0].mxu0 %v1056
        %v1098 = vpop.f32.mrb[0].mxu0
        %v1099 = vadd.f32 0.0, %v1098
        %v1100 = vpop.f32.mrb[0].mxu0
        %v1101 = vpop.f32.mrb[0].mxu0
        %v1102 = vadd.f32 0.0, %v1101
        %v1103 = vpop.f32.mrb[0].mxu0
        %1104 = vmatprep.mubr.bf16.mxu0 0
        %1105 = vmatmul.mubr.bf16.gmra.mrb[0].mxu0 %v1057
        %v1106 = vpop.f32.mrb[0].mxu0
        %v1107 = vadd.f32 0.0, %v1106
        %v1108 = vpop.f32.mrb[0].mxu0
        %v1109 = vpop.f32.mrb[0].mxu0
        %v1110 = vadd.f32 0.0, %v1109
        %v1111 = vpop.f32.mrb[0].mxu0
        %1112 = vmatprep.mubr.bf16.mxu0 0
        %1113 = vmatmul.mubr.bf16.gmra.mrb[0].mxu0 %v1058
        %v1114 = vpop.f32.mrb[0].mxu0
        %v1115 = vadd.f32 0.0, %v1114
        %v1116 = vpop.f32.mrb[0].mxu0
        %v1117 = vpop.f32.mrb[0].mxu0
        %v1118 = vadd.f32 0.0, %v1117
        %v1119 = vpop.f32.mrb[0].mxu0
        %1120 = vmatprep.mubr.bf16.mxu0 0
        %1121 = vmatmul.mubr.bf16.gmra.mrb[0].mxu0 %v1059
        %v1122 = vpop.f32.mrb[0].mxu0
        %v1123 = vadd.f32 0.0, %v1122
        %v1124 = vpop.f32.mrb[0].mxu0
        %v1125 = vpop.f32.mrb[0].mxu0
        %v1126 = vadd.f32 0.0, %v1125
        %v1127 = vpop.f32.mrb[0].mxu0
        %1128 = vmatprep.mubr.bf16.mxu0 0
        %1129 = vmatmul.mubr.bf16.gmra.mrb[0].mxu0 %v1060
        %v1130 = vpop.f32.mrb[0].mxu0
        %v1131 = vadd.f32 0.0, %v1130
        %v1132 = vpop.f32.mrb[0].mxu0
        %v1133 = vpop.f32.mrb[0].mxu0
        %v1134 = vadd.f32 0.0, %v1133
        %v1135 = vpop.f32.mrb[0].mxu0
        %1136 = vmatprep.mubr.bf16.mxu0 0
        %1137 = vmatmul.mubr.bf16.gmra.mrb[0].mxu0 %v1061
        %v1138 = vpop.f32.mrb[0].mxu0
        %v1139 = vadd.f32 0.0, %v1138
        %v1140 = vpop.f32.mrb[0].mxu0
        %v1141 = vpop.f32.mrb[0].mxu0
        %v1142 = vadd.f32 0.0, %v1141
        %v1143 = vpop.f32.mrb[0].mxu0
        %1144 = vmatprep.mubr.bf16.mxu0 0
        %1145 = vmatmul.mubr.bf16.gmra.mrb[0].mxu0 %v1062
        %v1146 = vpop.f32.mrb[0].mxu0
        %v1147 = vadd.f32 0.0, %v1146
        %v1148 = vpop.f32.mrb[0].mxu0
        %v1149 = vpop.f32.mrb[0].mxu0
        %v1150 = vadd.f32 0.0, %v1149
        %v1151 = vpop.f32.mrb[0].mxu0
        %1152 = vmatprep.mubr.bf16.mxu0 0
        %1153 = vmatmul.mubr.bf16.gmra.mrb[0].mxu0 %v1063
        %v1154 = vpop.f32.mrb[0].mxu0
        %v1155 = vadd.f32 0.0, %v1154
        %v1156 = vpop.f32.mrb[0].mxu0
        %v1157 = vpop.f32.mrb[0].mxu0
        %v1158 = vadd.f32 0.0, %v1157
        %v1159 = vpop.f32.mrb[0].mxu0
        %1160 = vdwg.mxu0
        %s1161 = scalar_lea.vmem %s362, 128 [#allocation10]
        %v1162 = vld [vmem:[%s1161] sm:$0xff]
        %v1163 = vld [vmem:[%s1161 + $0x8] sm:$0xff]
        %v1164 = vld [vmem:[%s1161 + $0x10] sm:$0xff]
        %v1165 = vld [vmem:[%s1161 + $0x18] sm:$0xff]
        %v1166 = vld [vmem:[%s1161 + $0x20] sm:$0xff]
        %v1167 = vld [vmem:[%s1161 + $0x28] sm:$0xff]
        %v1168 = vld [vmem:[%s1161 + $0x30] sm:$0xff]
        %v1169 = vld [vmem:[%s1161 + $0x38] sm:$0xff]
        %v1170 = vld [vmem:[%s1161 + $0x40] sm:$0xff]
        %v1171 = vld [vmem:[%s1161 + $0x48] sm:$0xff]
        %v1172 = vld [vmem:[%s1161 + $0x50] sm:$0xff]
        %v1173 = vld [vmem:[%s1161 + $0x58] sm:$0xff]
        %v1174 = vld [vmem:[%s1161 + $0x60] sm:$0xff]
        %v1175 = vld [vmem:[%s1161 + $0x68] sm:$0xff]
        %v1176 = vld [vmem:[%s1161 + $0x70] sm:$0xff]
        %v1177 = vld [vmem:[%s1161 + $0x78] sm:$0xff]
        %vm1178 = vcmp.gt.f32.partialorder %v1099, %v1162
        %vm1179 = vcmp.gt.f32.partialorder %v1102, %v1163
        %vm1180 = vcmp.gt.f32.partialorder %v1107, %v1164
        %vm1181 = vcmp.gt.f32.partialorder %v1110, %v1165
        %vm1182 = vcmp.gt.f32.partialorder %v1115, %v1166
        %vm1183 = vcmp.gt.f32.partialorder %v1118, %v1167
        %vm1184 = vcmp.gt.f32.partialorder %v1123, %v1168
        %vm1185 = vcmp.gt.f32.partialorder %v1126, %v1169
        %vm1186 = vcmp.gt.f32.partialorder %v1131, %v1170
        %vm1187 = vcmp.gt.f32.partialorder %v1134, %v1171
        %vm1188 = vcmp.gt.f32.partialorder %v1139, %v1172
        %vm1189 = vcmp.gt.f32.partialorder %v1142, %v1173
        %vm1190 = vcmp.gt.f32.partialorder %v1147, %v1174
        %vm1191 = vcmp.gt.f32.partialorder %v1150, %v1175
        %vm1192 = vcmp.gt.f32.partialorder %v1155, %v1176
        %vm1193 = vcmp.gt.f32.partialorder %v1158, %v1177
        %v1194 = vsel %vm1178, 1, 0
        %v1195 = vsel %vm1179, 1, 0
        %v1196 = vsel %vm1180, 1, 0
        %v1197 = vsel %vm1181, 1, 0
        %v1198 = vsel %vm1182, 1, 0
        %v1199 = vsel %vm1183, 1, 0
        %v1200 = vsel %vm1184, 1, 0
        %v1201 = vsel %vm1185, 1, 0
        %v1202 = vsel %vm1186, 1, 0
        %v1203 = vsel %vm1187, 1, 0
        %v1204 = vsel %vm1188, 1, 0
        %v1205 = vsel %vm1189, 1, 0
        %v1206 = vsel %vm1190, 1, 0
        %v1207 = vsel %vm1191, 1, 0
        %v1208 = vsel %vm1192, 1, 0
        %v1209 = vsel %vm1193, 1, 0
        %v1210 = vcvt.s32.f32 %v1194
        %v1211 = vcvt.s32.f32 %v1195
        %v1212 = vcvt.s32.f32 %v1196
        %v1213 = vcvt.s32.f32 %v1197
        %v1214 = vcvt.s32.f32 %v1198
        %v1215 = vcvt.s32.f32 %v1199
        %v1216 = vcvt.s32.f32 %v1200
        %v1217 = vcvt.s32.f32 %v1201
        %v1218 = vcvt.s32.f32 %v1202
        %v1219 = vcvt.s32.f32 %v1203
        %v1220 = vcvt.s32.f32 %v1204
        %v1221 = vcvt.s32.f32 %v1205
        %v1222 = vcvt.s32.f32 %v1206
        %v1223 = vcvt.s32.f32 %v1207
        %v1224 = vcvt.s32.f32 %v1208
        %v1225 = vcvt.s32.f32 %v1209
        %v1226 = vpack.c.bf16 %v1211, %v1210
        %v1227 = vpack.c.bf16 %v1213, %v1212
        %v1228 = vpack.c.bf16 %v1215, %v1214
        %v1229 = vpack.c.bf16 %v1217, %v1216
        %v1230 = vpack.c.bf16 %v1219, %v1218
        %v1231 = vpack.c.bf16 %v1221, %v1220
        %v1232 = vpack.c.bf16 %v1223, %v1222
        %v1233 = vpack.c.bf16 %v1225, %v1224
        %1234 = vmatprep.subr.bf16.mxu0 0
        %1235 = vmatpush1.bf16.msra.mxu0 %v492
        %1236 = vmatprep.subr.bf16.mxu0 0
        %1237 = vmatpush1.bf16.msra.mxu0 %v493
        %1238 = vmatprep.subr.bf16.mxu0 0
        %1239 = vmatpush1.bf16.msra.mxu0 %v494
        %1240 = vmatprep.subr.bf16.mxu0 0
        %1241 = vmatpush1.bf16.msra.mxu0 %v495
        %1242 = vmatprep.subr.bf16.mxu0 0
        %1243 = vmatpush1.bf16.msra.mxu0 %v496
        %1244 = vmatprep.subr.bf16.mxu0 0
        %1245 = vmatpush1.bf16.msra.mxu0 %v497
        %1246 = vmatprep.subr.bf16.mxu0 0
        %1247 = vmatpush1.bf16.msra.mxu0 %v498
        %1248 = vmatprep.subr.bf16.mxu0 0
        %1249 = vmatpush1.bf16.msra.mxu0 %v499
        %1250 = vmatprep.subr.bf16.mxu0 0
        %1251 = vmatpush1.bf16.msra.mxu0 0
        %1252 = vmatprep.subr.bf16.mxu0 0
        %1253 = vmatpush1.bf16.msra.mxu0 0
        %1254 = vmatprep.subr.bf16.mxu0 0
        %1255 = vmatpush1.bf16.msra.mxu0 0
        %1256 = vmatprep.subr.bf16.mxu0 0
        %1257 = vmatpush1.bf16.msra.mxu0 0
        %1258 = vmatprep.subr.bf16.mxu0 0
        %1259 = vmatpush1.bf16.msra.mxu0 0
        %1260 = vmatprep.subr.bf16.mxu0 0
        %1261 = vmatpush1.bf16.msra.mxu0 0
        %1262 = vmatprep.subr.bf16.mxu0 0
        %1263 = vmatpush1.bf16.msra.mxu0 0
        %1264 = vmatprep.subr.bf16.mxu0 0
        %1265 = vmatpush1.bf16.msra.mxu0 0
        %1266 = vmatprep.mubr.bf16.mxu0 0
        %1267 = vmatmul.mubr.bf16.gmra.mrb[0].mxu0 %v1226
        %v1268 = vpop.f32.mrb[0].mxu0
        %v1269 = vadd.f32 0.0, %v1268
        %v1270 = vpop.f32.mrb[0].mxu0
        %v1271 = vpop.f32.mrb[0].mxu0
        %v1272 = vadd.f32 0.0, %v1271
        %v1273 = vpop.f32.mrb[0].mxu0
        %1274 = vmatprep.mubr.bf16.mxu0 0
        %1275 = vmatmul.mubr.bf16.gmra.mrb[0].mxu0 %v1227
        %v1276 = vpop.f32.mrb[0].mxu0
        %v1277 = vadd.f32 0.0, %v1276
        %v1278 = vpop.f32.mrb[0].mxu0
        %v1279 = vpop.f32.mrb[0].mxu0
        %v1280 = vadd.f32 0.0, %v1279
        %v1281 = vpop.f32.mrb[0].mxu0
        %1282 = vmatprep.mubr.bf16.mxu0 0
        %1283 = vmatmul.mubr.bf16.gmra.mrb[0].mxu0 %v1228
        %v1284 = vpop.f32.mrb[0].mxu0
        %v1285 = vadd.f32 0.0, %v1284
        %v1286 = vpop.f32.mrb[0].mxu0
        %v1287 = vpop.f32.mrb[0].mxu0
        %v1288 = vadd.f32 0.0, %v1287
        %v1289 = vpop.f32.mrb[0].mxu0
        %1290 = vmatprep.mubr.bf16.mxu0 0
        %1291 = vmatmul.mubr.bf16.gmra.mrb[0].mxu0 %v1229
        %v1292 = vpop.f32.mrb[0].mxu0
        %v1293 = vadd.f32 0.0, %v1292
        %v1294 = vpop.f32.mrb[0].mxu0
        %v1295 = vpop.f32.mrb[0].mxu0
        %v1296 = vadd.f32 0.0, %v1295
        %v1297 = vpop.f32.mrb[0].mxu0
        %1298 = vmatprep.mubr.bf16.mxu0 0
        %1299 = vmatmul.mubr.bf16.gmra.mrb[0].mxu0 %v1230
        %v1300 = vpop.f32.mrb[0].mxu0
        %v1301 = vadd.f32 0.0, %v1300
        %v1302 = vpop.f32.mrb[0].mxu0
        %v1303 = vpop.f32.mrb[0].mxu0
        %v1304 = vadd.f32 0.0, %v1303
        %v1305 = vpop.f32.mrb[0].mxu0
        %1306 = vmatprep.mubr.bf16.mxu0 0
        %1307 = vmatmul.mubr.bf16.gmra.mrb[0].mxu0 %v1231
        %v1308 = vpop.f32.mrb[0].mxu0
        %v1309 = vadd.f32 0.0, %v1308
        %v1310 = vpop.f32.mrb[0].mxu0
        %v1311 = vpop.f32.mrb[0].mxu0
        %v1312 = vadd.f32 0.0, %v1311
        %v1313 = vpop.f32.mrb[0].mxu0
        %1314 = vmatprep.mubr.bf16.mxu0 0
        %1315 = vmatmul.mubr.bf16.gmra.mrb[0].mxu0 %v1232
        %v1316 = vpop.f32.mrb[0].mxu0
        %v1317 = vadd.f32 0.0, %v1316
        %v1318 = vpop.f32.mrb[0].mxu0
        %v1319 = vpop.f32.mrb[0].mxu0
        %v1320 = vadd.f32 0.0, %v1319
        %v1321 = vpop.f32.mrb[0].mxu0
        %1322 = vmatprep.mubr.bf16.mxu0 0
        %1323 = vmatmul.mubr.bf16.gmra.mrb[0].mxu0 %v1233
        %v1324 = vpop.f32.mrb[0].mxu0
        %v1325 = vadd.f32 0.0, %v1324
        %v1326 = vpop.f32.mrb[0].mxu0
        %v1327 = vpop.f32.mrb[0].mxu0
        %v1328 = vadd.f32 0.0, %v1327
        %v1329 = vpop.f32.mrb[0].mxu0
        %1330 = vdwg.mxu0
        %s1331 = scalar_lea.vmem %s353, 256 [#allocation8]
        %v1332 = vld [vmem:[%s1331] sm:$0xff]
        %v1333 = vld [vmem:[%s1331 + $0x8] sm:$0xff]
        %v1334 = vld [vmem:[%s1331 + $0x10] sm:$0xff]
        %v1335 = vld [vmem:[%s1331 + $0x18] sm:$0xff]
        %v1336 = vld [vmem:[%s1331 + $0x20] sm:$0xff]
        %v1337 = vld [vmem:[%s1331 + $0x28] sm:$0xff]
        %v1338 = vld [vmem:[%s1331 + $0x30] sm:$0xff]
        %v1339 = vld [vmem:[%s1331 + $0x38] sm:$0xff]
        %v1340 = vld [vmem:[%s1331 + $0x40] sm:$0xff]
        %v1341 = vld [vmem:[%s1331 + $0x48] sm:$0xff]
        %v1342 = vld [vmem:[%s1331 + $0x50] sm:$0xff]
        %v1343 = vld [vmem:[%s1331 + $0x58] sm:$0xff]
        %v1344 = vld [vmem:[%s1331 + $0x60] sm:$0xff]
        %v1345 = vld [vmem:[%s1331 + $0x68] sm:$0xff]
        %v1346 = vld [vmem:[%s1331 + $0x70] sm:$0xff]
        %v1347 = vld [vmem:[%s1331 + $0x78] sm:$0xff]
        %vm1348 = vcmp.gt.f32.partialorder %v1269, %v1332
        %vm1349 = vcmp.gt.f32.partialorder %v1272, %v1333
        %vm1350 = vcmp.gt.f32.partialorder %v1277, %v1334
        %vm1351 = vcmp.gt.f32.partialorder %v1280, %v1335
        %vm1352 = vcmp.gt.f32.partialorder %v1285, %v1336
        %vm1353 = vcmp.gt.f32.partialorder %v1288, %v1337
        %vm1354 = vcmp.gt.f32.partialorder %v1293, %v1338
        %vm1355 = vcmp.gt.f32.partialorder %v1296, %v1339
        %vm1356 = vcmp.gt.f32.partialorder %v1301, %v1340
        %vm1357 = vcmp.gt.f32.partialorder %v1304, %v1341
        %vm1358 = vcmp.gt.f32.partialorder %v1309, %v1342
        %vm1359 = vcmp.gt.f32.partialorder %v1312, %v1343
        %vm1360 = vcmp.gt.f32.partialorder %v1317, %v1344
        %vm1361 = vcmp.gt.f32.partialorder %v1320, %v1345
        %vm1362 = vcmp.gt.f32.partialorder %v1325, %v1346
        %vm1363 = vcmp.gt.f32.partialorder %v1328, %v1347
        %v1364 = vsel %vm1348, 1, 0
        %v1365 = vsel %vm1349, 1, 0
        %v1366 = vsel %vm1350, 1, 0
        %v1367 = vsel %vm1351, 1, 0
        %v1368 = vsel %vm1352, 1, 0
        %v1369 = vsel %vm1353, 1, 0
        %v1370 = vsel %vm1354, 1, 0
        %v1371 = vsel %vm1355, 1, 0
        %v1372 = vsel %vm1356, 1, 0
        %v1373 = vsel %vm1357, 1, 0
        %v1374 = vsel %vm1358, 1, 0
        %v1375 = vsel %vm1359, 1, 0
        %v1376 = vsel %vm1360, 1, 0
        %v1377 = vsel %vm1361, 1, 0
        %v1378 = vsel %vm1362, 1, 0
        %v1379 = vsel %vm1363, 1, 0
        %v1380 = vcvt.s32.f32 %v1364
        %v1381 = vcvt.s32.f32 %v1365
        %v1382 = vcvt.s32.f32 %v1366
        %v1383 = vcvt.s32.f32 %v1367
        %v1384 = vcvt.s32.f32 %v1368
        %v1385 = vcvt.s32.f32 %v1369
        %v1386 = vcvt.s32.f32 %v1370
        %v1387 = vcvt.s32.f32 %v1371
        %v1388 = vcvt.s32.f32 %v1372
        %v1389 = vcvt.s32.f32 %v1373
        %v1390 = vcvt.s32.f32 %v1374
        %v1391 = vcvt.s32.f32 %v1375
        %v1392 = vcvt.s32.f32 %v1376
        %v1393 = vcvt.s32.f32 %v1377
        %v1394 = vcvt.s32.f32 %v1378
        %v1395 = vcvt.s32.f32 %v1379
        %v1396 = vpack.c.bf16 %v1381, %v1380
        %v1397 = vpack.c.bf16 %v1383, %v1382
        %v1398 = vpack.c.bf16 %v1385, %v1384
        %v1399 = vpack.c.bf16 %v1387, %v1386
        %v1400 = vpack.c.bf16 %v1389, %v1388
        %v1401 = vpack.c.bf16 %v1391, %v1390
        %v1402 = vpack.c.bf16 %v1393, %v1392
        %v1403 = vpack.c.bf16 %v1395, %v1394
        %1404 = vmatprep.subr.bf16.mxu0 0
        %1405 = vmatpush1.bf16.msra.mxu0 %v709
        %1406 = vmatprep.subr.bf16.mxu0 0
        %1407 = vmatpush1.bf16.msra.mxu0 %v710
        %1408 = vmatprep.subr.bf16.mxu0 0
        %1409 = vmatpush1.bf16.msra.mxu0 %v711
        %1410 = vmatprep.subr.bf16.mxu0 0
        %1411 = vmatpush1.bf16.msra.mxu0 %v712
        %1412 = vmatprep.subr.bf16.mxu0 0
        %1413 = vmatpush1.bf16.msra.mxu0 %v713
        %1414 = vmatprep.subr.bf16.mxu0 0
        %1415 = vmatpush1.bf16.msra.mxu0 %v714
        %1416 = vmatprep.subr.bf16.mxu0 0
        %1417 = vmatpush1.bf16.msra.mxu0 %v715
        %1418 = vmatprep.subr.bf16.mxu0 0
        %1419 = vmatpush1.bf16.msra.mxu0 %v716
        %1420 = vmatprep.subr.bf16.mxu0 0
        %1421 = vmatpush1.bf16.msra.mxu0 0
        %1422 = vmatprep.subr.bf16.mxu0 0
        %1423 = vmatpush1.bf16.msra.mxu0 0
        %1424 = vmatprep.subr.bf16.mxu0 0
        %1425 = vmatpush1.bf16.msra.mxu0 0
        %1426 = vmatprep.subr.bf16.mxu0 0
        %1427 = vmatpush1.bf16.msra.mxu0 0
        %1428 = vmatprep.subr.bf16.mxu0 0
        %1429 = vmatpush1.bf16.msra.mxu0 0
        %1430 = vmatprep.subr.bf16.mxu0 0
        %1431 = vmatpush1.bf16.msra.mxu0 0
        %1432 = vmatprep.subr.bf16.mxu0 0
        %1433 = vmatpush1.bf16.msra.mxu0 0
        %1434 = vmatprep.subr.bf16.mxu0 0
        %1435 = vmatpush1.bf16.msra.mxu0 0
        %1436 = vmatprep.mubr.bf16.mxu0 0
        %1437 = vmatmul.mubr.bf16.gmra.mrb[0].mxu0 %v1396
        %v1438 = vpop.f32.mrb[0].mxu0
        %v1439 = vadd.f32 0.0, %v1438
        %v1440 = vpop.f32.mrb[0].mxu0
        %v1441 = vpop.f32.mrb[0].mxu0
        %v1442 = vadd.f32 0.0, %v1441
        %v1443 = vpop.f32.mrb[0].mxu0
        %1444 = vmatprep.mubr.bf16.mxu0 0
        %1445 = vmatmul.mubr.bf16.gmra.mrb[0].mxu0 %v1397
        %v1446 = vpop.f32.mrb[0].mxu0
        %v1447 = vadd.f32 0.0, %v1446
        %v1448 = vpop.f32.mrb[0].mxu0
        %v1449 = vpop.f32.mrb[0].mxu0
        %v1450 = vadd.f32 0.0, %v1449
        %v1451 = vpop.f32.mrb[0].mxu0
        %1452 = vmatprep.mubr.bf16.mxu0 0
        %1453 = vmatmul.mubr.bf16.gmra.mrb[0].mxu0 %v1398
        %v1454 = vpop.f32.mrb[0].mxu0
        %v1455 = vadd.f32 0.0, %v1454
        %v1456 = vpop.f32.mrb[0].mxu0
        %v1457 = vpop.f32.mrb[0].mxu0
        %v1458 = vadd.f32 0.0, %v1457
        %v1459 = vpop.f32.mrb[0].mxu0
        %1460 = vmatprep.mubr.bf16.mxu0 0
        %1461 = vmatmul.mubr.bf16.gmra.mrb[0].mxu0 %v1399
        %v1462 = vpop.f32.mrb[0].mxu0
        %v1463 = vadd.f32 0.0, %v1462
        %v1464 = vpop.f32.mrb[0].mxu0
        %v1465 = vpop.f32.mrb[0].mxu0
        %v1466 = vadd.f32 0.0, %v1465
        %v1467 = vpop.f32.mrb[0].mxu0
        %1468 = vmatprep.mubr.bf16.mxu0 0
        %1469 = vmatmul.mubr.bf16.gmra.mrb[0].mxu0 %v1400
        %v1470 = vpop.f32.mrb[0].mxu0
        %v1471 = vadd.f32 0.0, %v1470
        %v1472 = vpop.f32.mrb[0].mxu0
        %v1473 = vpop.f32.mrb[0].mxu0
        %v1474 = vadd.f32 0.0, %v1473
        %v1475 = vpop.f32.mrb[0].mxu0
        %1476 = vmatprep.mubr.bf16.mxu0 0
        %1477 = vmatmul.mubr.bf16.gmra.mrb[0].mxu0 %v1401
        %v1478 = vpop.f32.mrb[0].mxu0
        %v1479 = vadd.f32 0.0, %v1478
        %v1480 = vpop.f32.mrb[0].mxu0
        %v1481 = vpop.f32.mrb[0].mxu0
        %v1482 = vadd.f32 0.0, %v1481
        %v1483 = vpop.f32.mrb[0].mxu0
        %1484 = vmatprep.mubr.bf16.mxu0 0
        %1485 = vmatmul.mubr.bf16.gmra.mrb[0].mxu0 %v1402
        %v1486 = vpop.f32.mrb[0].mxu0
        %v1487 = vadd.f32 0.0, %v1486
        %v1488 = vpop.f32.mrb[0].mxu0
        %v1489 = vpop.f32.mrb[0].mxu0
        %v1490 = vadd.f32 0.0, %v1489
        %v1491 = vpop.f32.mrb[0].mxu0
        %1492 = vmatprep.mubr.bf16.mxu0 0
        %1493 = vmatmul.mubr.bf16.gmra.mrb[0].mxu0 %v1403
        %v1494 = vpop.f32.mrb[0].mxu0
        %v1495 = vadd.f32 0.0, %v1494
        %v1496 = vpop.f32.mrb[0].mxu0
        %v1497 = vpop.f32.mrb[0].mxu0
        %v1498 = vadd.f32 0.0, %v1497
        %v1499 = vpop.f32.mrb[0].mxu0
        %1500 = vdwg.mxu0
        %s1501 = scalar_lea.vmem %s362, 256 [#allocation10]
        %v1502 = vld [vmem:[%s1501] sm:$0xff]
        %v1503 = vld [vmem:[%s1501 + $0x8] sm:$0xff]
        %v1504 = vld [vmem:[%s1501 + $0x10] sm:$0xff]
        %v1505 = vld [vmem:[%s1501 + $0x18] sm:$0xff]
        %v1506 = vld [vmem:[%s1501 + $0x20] sm:$0xff]
        %v1507 = vld [vmem:[%s1501 + $0x28] sm:$0xff]
        %v1508 = vld [vmem:[%s1501 + $0x30] sm:$0xff]
        %v1509 = vld [vmem:[%s1501 + $0x38] sm:$0xff]
        %v1510 = vld [vmem:[%s1501 + $0x40] sm:$0xff]
        %v1511 = vld [vmem:[%s1501 + $0x48] sm:$0xff]
        %v1512 = vld [vmem:[%s1501 + $0x50] sm:$0xff]
        %v1513 = vld [vmem:[%s1501 + $0x58] sm:$0xff]
        %v1514 = vld [vmem:[%s1501 + $0x60] sm:$0xff]
        %v1515 = vld [vmem:[%s1501 + $0x68] sm:$0xff]
        %v1516 = vld [vmem:[%s1501 + $0x70] sm:$0xff]
        %v1517 = vld [vmem:[%s1501 + $0x78] sm:$0xff]
        %vm1518 = vcmp.gt.f32.partialorder %v1439, %v1502
        %vm1519 = vcmp.gt.f32.partialorder %v1442, %v1503
        %vm1520 = vcmp.gt.f32.partialorder %v1447, %v1504
        %vm1521 = vcmp.gt.f32.partialorder %v1450, %v1505
        %vm1522 = vcmp.gt.f32.partialorder %v1455, %v1506
        %vm1523 = vcmp.gt.f32.partialorder %v1458, %v1507
        %vm1524 = vcmp.gt.f32.partialorder %v1463, %v1508
        %vm1525 = vcmp.gt.f32.partialorder %v1466, %v1509
        %vm1526 = vcmp.gt.f32.partialorder %v1471, %v1510
        %vm1527 = vcmp.gt.f32.partialorder %v1474, %v1511
        %vm1528 = vcmp.gt.f32.partialorder %v1479, %v1512
        %vm1529 = vcmp.gt.f32.partialorder %v1482, %v1513
        %vm1530 = vcmp.gt.f32.partialorder %v1487, %v1514
        %vm1531 = vcmp.gt.f32.partialorder %v1490, %v1515
        %vm1532 = vcmp.gt.f32.partialorder %v1495, %v1516
        %vm1533 = vcmp.gt.f32.partialorder %v1498, %v1517
        %v1534 = vsel %vm1518, 1, 0
        %v1535 = vsel %vm1519, 1, 0
        %v1536 = vsel %vm1520, 1, 0
        %v1537 = vsel %vm1521, 1, 0
        %v1538 = vsel %vm1522, 1, 0
        %v1539 = vsel %vm1523, 1, 0
        %v1540 = vsel %vm1524, 1, 0
        %v1541 = vsel %vm1525, 1, 0
        %v1542 = vsel %vm1526, 1, 0
        %v1543 = vsel %vm1527, 1, 0
        %v1544 = vsel %vm1528, 1, 0
        %v1545 = vsel %vm1529, 1, 0
        %v1546 = vsel %vm1530, 1, 0
        %v1547 = vsel %vm1531, 1, 0
        %v1548 = vsel %vm1532, 1, 0
        %v1549 = vsel %vm1533, 1, 0
        %v1550 = vcvt.s32.f32 %v1534
        %v1551 = vcvt.s32.f32 %v1535
        %v1552 = vcvt.s32.f32 %v1536
        %v1553 = vcvt.s32.f32 %v1537
        %v1554 = vcvt.s32.f32 %v1538
        %v1555 = vcvt.s32.f32 %v1539
        %v1556 = vcvt.s32.f32 %v1540
        %v1557 = vcvt.s32.f32 %v1541
        %v1558 = vcvt.s32.f32 %v1542
        %v1559 = vcvt.s32.f32 %v1543
        %v1560 = vcvt.s32.f32 %v1544
        %v1561 = vcvt.s32.f32 %v1545
        %v1562 = vcvt.s32.f32 %v1546
        %v1563 = vcvt.s32.f32 %v1547
        %v1564 = vcvt.s32.f32 %v1548
        %v1565 = vcvt.s32.f32 %v1549
        %v1566 = vpack.c.bf16 %v1551, %v1550
        %v1567 = vpack.c.bf16 %v1553, %v1552
        %v1568 = vpack.c.bf16 %v1555, %v1554
        %v1569 = vpack.c.bf16 %v1557, %v1556
        %v1570 = vpack.c.bf16 %v1559, %v1558
        %v1571 = vpack.c.bf16 %v1561, %v1560
        %v1572 = vpack.c.bf16 %v1563, %v1562
        %v1573 = vpack.c.bf16 %v1565, %v1564
        %1574 = vmatprep.subr.bf16.mxu0 0
        %1575 = vmatpush1.bf16.msra.mxu0 %v492
        %1576 = vmatprep.subr.bf16.mxu0 0
        %1577 = vmatpush1.bf16.msra.mxu0 %v493
        %1578 = vmatprep.subr.bf16.mxu0 0
        %1579 = vmatpush1.bf16.msra.mxu0 %v494
        %1580 = vmatprep.subr.bf16.mxu0 0
        %1581 = vmatpush1.bf16.msra.mxu0 %v495
        %1582 = vmatprep.subr.bf16.mxu0 0
        %1583 = vmatpush1.bf16.msra.mxu0 %v496
        %1584 = vmatprep.subr.bf16.mxu0 0
        %1585 = vmatpush1.bf16.msra.mxu0 %v497
        %1586 = vmatprep.subr.bf16.mxu0 0
        %1587 = vmatpush1.bf16.msra.mxu0 %v498
        %1588 = vmatprep.subr.bf16.mxu0 0
        %1589 = vmatpush1.bf16.msra.mxu0 %v499
        %1590 = vmatprep.subr.bf16.mxu0 0
        %1591 = vmatpush1.bf16.msra.mxu0 0
        %1592 = vmatprep.subr.bf16.mxu0 0
        %1593 = vmatpush1.bf16.msra.mxu0 0
        %1594 = vmatprep.subr.bf16.mxu0 0
        %1595 = vmatpush1.bf16.msra.mxu0 0
        %1596 = vmatprep.subr.bf16.mxu0 0
        %1597 = vmatpush1.bf16.msra.mxu0 0
        %1598 = vmatprep.subr.bf16.mxu0 0
        %1599 = vmatpush1.bf16.msra.mxu0 0
        %1600 = vmatprep.subr.bf16.mxu0 0
        %1601 = vmatpush1.bf16.msra.mxu0 0
        %1602 = vmatprep.subr.bf16.mxu0 0
        %1603 = vmatpush1.bf16.msra.mxu0 0
        %1604 = vmatprep.subr.bf16.mxu0 0
        %1605 = vmatpush1.bf16.msra.mxu0 0
        %1606 = vmatprep.mubr.bf16.mxu0 0
        %1607 = vmatmul.mubr.bf16.gmra.mrb[0].mxu0 %v1566
        %v1608 = vpop.f32.mrb[0].mxu0
        %v1609 = vadd.f32 0.0, %v1608
        %v1610 = vpop.f32.mrb[0].mxu0
        %v1611 = vpop.f32.mrb[0].mxu0
        %v1612 = vadd.f32 0.0, %v1611
        %v1613 = vpop.f32.mrb[0].mxu0
        %1614 = vmatprep.mubr.bf16.mxu0 0
        %1615 = vmatmul.mubr.bf16.gmra.mrb[0].mxu0 %v1567
        %v1616 = vpop.f32.mrb[0].mxu0
        %v1617 = vadd.f32 0.0, %v1616
        %v1618 = vpop.f32.mrb[0].mxu0
        %v1619 = vpop.f32.mrb[0].mxu0
        %v1620 = vadd.f32 0.0, %v1619
        %v1621 = vpop.f32.mrb[0].mxu0
        %1622 = vmatprep.mubr.bf16.mxu0 0
        %1623 = vmatmul.mubr.bf16.gmra.mrb[0].mxu0 %v1568
        %v1624 = vpop.f32.mrb[0].mxu0
        %v1625 = vadd.f32 0.0, %v1624
        %v1626 = vpop.f32.mrb[0].mxu0
        %v1627 = vpop.f32.mrb[0].mxu0
        %v1628 = vadd.f32 0.0, %v1627
        %v1629 = vpop.f32.mrb[0].mxu0
        %1630 = vmatprep.mubr.bf16.mxu0 0
        %1631 = vmatmul.mubr.bf16.gmra.mrb[0].mxu0 %v1569
        %v1632 = vpop.f32.mrb[0].mxu0
        %v1633 = vadd.f32 0.0, %v1632
        %v1634 = vpop.f32.mrb[0].mxu0
        %v1635 = vpop.f32.mrb[0].mxu0
        %v1636 = vadd.f32 0.0, %v1635
        %v1637 = vpop.f32.mrb[0].mxu0
        %1638 = vmatprep.mubr.bf16.mxu0 0
        %1639 = vmatmul.mubr.bf16.gmra.mrb[0].mxu0 %v1570
        %v1640 = vpop.f32.mrb[0].mxu0
        %v1641 = vadd.f32 0.0, %v1640
        %v1642 = vpop.f32.mrb[0].mxu0
        %v1643 = vpop.f32.mrb[0].mxu0
        %v1644 = vadd.f32 0.0, %v1643
        %v1645 = vpop.f32.mrb[0].mxu0
        %1646 = vmatprep.mubr.bf16.mxu0 0
        %1647 = vmatmul.mubr.bf16.gmra.mrb[0].mxu0 %v1571
        %v1648 = vpop.f32.mrb[0].mxu0
        %v1649 = vadd.f32 0.0, %v1648
        %v1650 = vpop.f32.mrb[0].mxu0
        %v1651 = vpop.f32.mrb[0].mxu0
        %v1652 = vadd.f32 0.0, %v1651
        %v1653 = vpop.f32.mrb[0].mxu0
        %1654 = vmatprep.mubr.bf16.mxu0 0
        %1655 = vmatmul.mubr.bf16.gmra.mrb[0].mxu0 %v1572
        %v1656 = vpop.f32.mrb[0].mxu0
        %v1657 = vadd.f32 0.0, %v1656
        %v1658 = vpop.f32.mrb[0].mxu0
        %v1659 = vpop.f32.mrb[0].mxu0
        %v1660 = vadd.f32 0.0, %v1659
        %v1661 = vpop.f32.mrb[0].mxu0
        %1662 = vmatprep.mubr.bf16.mxu0 0
        %1663 = vmatmul.mubr.bf16.gmra.mrb[0].mxu0 %v1573
        %v1664 = vpop.f32.mrb[0].mxu0
        %v1665 = vadd.f32 0.0, %v1664
        %v1666 = vpop.f32.mrb[0].mxu0
        %v1667 = vpop.f32.mrb[0].mxu0
        %v1668 = vadd.f32 0.0, %v1667
        %v1669 = vpop.f32.mrb[0].mxu0
        %1670 = vdwg.mxu0
        %s1671 = scalar_lea.vmem %s353, 384 [#allocation8]
        %v1672 = vld [vmem:[%s1671] sm:$0xff]
        %v1673 = vld [vmem:[%s1671 + $0x8] sm:$0xff]
        %v1674 = vld [vmem:[%s1671 + $0x10] sm:$0xff]
        %v1675 = vld [vmem:[%s1671 + $0x18] sm:$0xff]
        %v1676 = vld [vmem:[%s1671 + $0x20] sm:$0xff]
        %v1677 = vld [vmem:[%s1671 + $0x28] sm:$0xff]
        %v1678 = vld [vmem:[%s1671 + $0x30] sm:$0xff]
        %v1679 = vld [vmem:[%s1671 + $0x38] sm:$0xff]
        %v1680 = vld [vmem:[%s1671 + $0x40] sm:$0xff]
        %v1681 = vld [vmem:[%s1671 + $0x48] sm:$0xff]
        %v1682 = vld [vmem:[%s1671 + $0x50] sm:$0xff]
        %v1683 = vld [vmem:[%s1671 + $0x58] sm:$0xff]
        %v1684 = vld [vmem:[%s1671 + $0x60] sm:$0xff]
        %v1685 = vld [vmem:[%s1671 + $0x68] sm:$0xff]
        %v1686 = vld [vmem:[%s1671 + $0x70] sm:$0xff]
        %v1687 = vld [vmem:[%s1671 + $0x78] sm:$0xff]
        %vm1688 = vcmp.gt.f32.partialorder %v1609, %v1672
        %vm1689 = vcmp.gt.f32.partialorder %v1612, %v1673
        %vm1690 = vcmp.gt.f32.partialorder %v1617, %v1674
        %vm1691 = vcmp.gt.f32.partialorder %v1620, %v1675
        %vm1692 = vcmp.gt.f32.partialorder %v1625, %v1676
        %vm1693 = vcmp.gt.f32.partialorder %v1628, %v1677
        %vm1694 = vcmp.gt.f32.partialorder %v1633, %v1678
        %vm1695 = vcmp.gt.f32.partialorder %v1636, %v1679
        %vm1696 = vcmp.gt.f32.partialorder %v1641, %v1680
        %vm1697 = vcmp.gt.f32.partialorder %v1644, %v1681
        %vm1698 = vcmp.gt.f32.partialorder %v1649, %v1682
        %vm1699 = vcmp.gt.f32.partialorder %v1652, %v1683
        %vm1700 = vcmp.gt.f32.partialorder %v1657, %v1684
        %vm1701 = vcmp.gt.f32.partialorder %v1660, %v1685
        %vm1702 = vcmp.gt.f32.partialorder %v1665, %v1686
        %vm1703 = vcmp.gt.f32.partialorder %v1668, %v1687
        %v1704 = vsel %vm1688, 1, 0
        %v1705 = vsel %vm1689, 1, 0
        %v1706 = vsel %vm1690, 1, 0
        %v1707 = vsel %vm1691, 1, 0
        %v1708 = vsel %vm1692, 1, 0
        %v1709 = vsel %vm1693, 1, 0
        %v1710 = vsel %vm1694, 1, 0
        %v1711 = vsel %vm1695, 1, 0
        %v1712 = vsel %vm1696, 1, 0
        %v1713 = vsel %vm1697, 1, 0
        %v1714 = vsel %vm1698, 1, 0
        %v1715 = vsel %vm1699, 1, 0
        %v1716 = vsel %vm1700, 1, 0
        %v1717 = vsel %vm1701, 1, 0
        %v1718 = vsel %vm1702, 1, 0
        %v1719 = vsel %vm1703, 1, 0
        %v1720 = vcvt.s32.f32 %v1704
        %v1721 = vcvt.s32.f32 %v1705
        %v1722 = vcvt.s32.f32 %v1706
        %v1723 = vcvt.s32.f32 %v1707
        %v1724 = vcvt.s32.f32 %v1708
        %v1725 = vcvt.s32.f32 %v1709
        %v1726 = vcvt.s32.f32 %v1710
        %v1727 = vcvt.s32.f32 %v1711
        %v1728 = vcvt.s32.f32 %v1712
        %v1729 = vcvt.s32.f32 %v1713
        %v1730 = vcvt.s32.f32 %v1714
        %v1731 = vcvt.s32.f32 %v1715
        %v1732 = vcvt.s32.f32 %v1716
        %v1733 = vcvt.s32.f32 %v1717
        %v1734 = vcvt.s32.f32 %v1718
        %v1735 = vcvt.s32.f32 %v1719
        %v1736 = vpack.c.bf16 %v1721, %v1720
        %v1737 = vpack.c.bf16 %v1723, %v1722
        %v1738 = vpack.c.bf16 %v1725, %v1724
        %v1739 = vpack.c.bf16 %v1727, %v1726
        %v1740 = vpack.c.bf16 %v1729, %v1728
        %v1741 = vpack.c.bf16 %v1731, %v1730
        %v1742 = vpack.c.bf16 %v1733, %v1732
        %v1743 = vpack.c.bf16 %v1735, %v1734
        %1744 = vmatprep.subr.bf16.mxu0 0
        %1745 = vmatpush1.bf16.msra.mxu0 %v709
        %1746 = vmatprep.subr.bf16.mxu0 0
        %1747 = vmatpush1.bf16.msra.mxu0 %v710
        %1748 = vmatprep.subr.bf16.mxu0 0
        %1749 = vmatpush1.bf16.msra.mxu0 %v711
        %1750 = vmatprep.subr.bf16.mxu0 0
        %1751 = vmatpush1.bf16.msra.mxu0 %v712
        %1752 = vmatprep.subr.bf16.mxu0 0
        %1753 = vmatpush1.bf16.msra.mxu0 %v713
        %1754 = vmatprep.subr.bf16.mxu0 0
        %1755 = vmatpush1.bf16.msra.mxu0 %v714
        %1756 = vmatprep.subr.bf16.mxu0 0
        %1757 = vmatpush1.bf16.msra.mxu0 %v715
        %1758 = vmatprep.subr.bf16.mxu0 0
        %1759 = vmatpush1.bf16.msra.mxu0 %v716
        %1760 = vmatprep.subr.bf16.mxu0 0
        %1761 = vmatpush1.bf16.msra.mxu0 0
        %1762 = vmatprep.subr.bf16.mxu0 0
        %1763 = vmatpush1.bf16.msra.mxu0 0
        %1764 = vmatprep.subr.bf16.mxu0 0
        %1765 = vmatpush1.bf16.msra.mxu0 0
        %1766 = vmatprep.subr.bf16.mxu0 0
        %1767 = vmatpush1.bf16.msra.mxu0 0
        %1768 = vmatprep.subr.bf16.mxu0 0
        %1769 = vmatpush1.bf16.msra.mxu0 0
        %1770 = vmatprep.subr.bf16.mxu0 0
        %1771 = vmatpush1.bf16.msra.mxu0 0
        %1772 = vmatprep.subr.bf16.mxu0 0
        %1773 = vmatpush1.bf16.msra.mxu0 0
        %1774 = vmatprep.subr.bf16.mxu0 0
        %1775 = vmatpush1.bf16.msra.mxu0 0
        %1776 = vmatprep.mubr.bf16.mxu0 0
        %1777 = vmatmul.mubr.bf16.gmra.mrb[0].mxu0 %v1736
        %v1778 = vpop.f32.mrb[0].mxu0
        %v1779 = vadd.f32 0.0, %v1778
        %v1780 = vpop.f32.mrb[0].mxu0
        %v1781 = vpop.f32.mrb[0].mxu0
        %v1782 = vadd.f32 0.0, %v1781
        %v1783 = vpop.f32.mrb[0].mxu0
        %1784 = vmatprep.mubr.bf16.mxu0 0
        %1785 = vmatmul.mubr.bf16.gmra.mrb[0].mxu0 %v1737
        %v1786 = vpop.f32.mrb[0].mxu0
        %v1787 = vadd.f32 0.0, %v1786
        %v1788 = vpop.f32.mrb[0].mxu0
        %v1789 = vpop.f32.mrb[0].mxu0
        %v1790 = vadd.f32 0.0, %v1789
        %v1791 = vpop.f32.mrb[0].mxu0
        %1792 = vmatprep.mubr.bf16.mxu0 0
        %1793 = vmatmul.mubr.bf16.gmra.mrb[0].mxu0 %v1738
        %v1794 = vpop.f32.mrb[0].mxu0
        %v1795 = vadd.f32 0.0, %v1794
        %v1796 = vpop.f32.mrb[0].mxu0
        %v1797 = vpop.f32.mrb[0].mxu0
        %v1798 = vadd.f32 0.0, %v1797
        %v1799 = vpop.f32.mrb[0].mxu0
        %1800 = vmatprep.mubr.bf16.mxu0 0
        %1801 = vmatmul.mubr.bf16.gmra.mrb[0].mxu0 %v1739
        %v1802 = vpop.f32.mrb[0].mxu0
        %v1803 = vadd.f32 0.0, %v1802
        %v1804 = vpop.f32.mrb[0].mxu0
        %v1805 = vpop.f32.mrb[0].mxu0
        %v1806 = vadd.f32 0.0, %v1805
        %v1807 = vpop.f32.mrb[0].mxu0
        %1808 = vmatprep.mubr.bf16.mxu0 0
        %1809 = vmatmul.mubr.bf16.gmra.mrb[0].mxu0 %v1740
        %v1810 = vpop.f32.mrb[0].mxu0
        %v1811 = vadd.f32 0.0, %v1810
        %v1812 = vpop.f32.mrb[0].mxu0
        %v1813 = vpop.f32.mrb[0].mxu0
        %v1814 = vadd.f32 0.0, %v1813
        %v1815 = vpop.f32.mrb[0].mxu0
        %1816 = vmatprep.mubr.bf16.mxu0 0
        %1817 = vmatmul.mubr.bf16.gmra.mrb[0].mxu0 %v1741
        %v1818 = vpop.f32.mrb[0].mxu0
        %v1819 = vadd.f32 0.0, %v1818
        %v1820 = vpop.f32.mrb[0].mxu0
        %v1821 = vpop.f32.mrb[0].mxu0
        %v1822 = vadd.f32 0.0, %v1821
        %v1823 = vpop.f32.mrb[0].mxu0
        %1824 = vmatprep.mubr.bf16.mxu0 0
        %1825 = vmatmul.mubr.bf16.gmra.mrb[0].mxu0 %v1742
        %v1826 = vpop.f32.mrb[0].mxu0
        %v1827 = vadd.f32 0.0, %v1826
        %v1828 = vpop.f32.mrb[0].mxu0
        %v1829 = vpop.f32.mrb[0].mxu0
        %v1830 = vadd.f32 0.0, %v1829
        %v1831 = vpop.f32.mrb[0].mxu0
        %1832 = vmatprep.mubr.bf16.mxu0 0
        %1833 = vmatmul.mubr.bf16.gmra.mrb[0].mxu0 %v1743
        %v1834 = vpop.f32.mrb[0].mxu0
        %v1835 = vadd.f32 0.0, %v1834
        %v1836 = vpop.f32.mrb[0].mxu0
        %v1837 = vpop.f32.mrb[0].mxu0
        %v1838 = vadd.f32 0.0, %v1837
        %v1839 = vpop.f32.mrb[0].mxu0
        %1840 = vdwg.mxu0
        %s1841 = scalar_lea.vmem %s362, 384 [#allocation10]
        %v1842 = vld [vmem:[%s1841] sm:$0xff]
        %v1843 = vld [vmem:[%s1841 + $0x8] sm:$0xff]
        %v1844 = vld [vmem:[%s1841 + $0x10] sm:$0xff]
        %v1845 = vld [vmem:[%s1841 + $0x18] sm:$0xff]
        %v1846 = vld [vmem:[%s1841 + $0x20] sm:$0xff]
        %v1847 = vld [vmem:[%s1841 + $0x28] sm:$0xff]
        %v1848 = vld [vmem:[%s1841 + $0x30] sm:$0xff]
        %v1849 = vld [vmem:[%s1841 + $0x38] sm:$0xff]
        %v1850 = vld [vmem:[%s1841 + $0x40] sm:$0xff]
        %v1851 = vld [vmem:[%s1841 + $0x48] sm:$0xff]
        %v1852 = vld [vmem:[%s1841 + $0x50] sm:$0xff]
        %v1853 = vld [vmem:[%s1841 + $0x58] sm:$0xff]
        %v1854 = vld [vmem:[%s1841 + $0x60] sm:$0xff]
        %v1855 = vld [vmem:[%s1841 + $0x68] sm:$0xff]
        %v1856 = vld [vmem:[%s1841 + $0x70] sm:$0xff]
        %v1857 = vld [vmem:[%s1841 + $0x78] sm:$0xff]
        %vm1858 = vcmp.gt.f32.partialorder %v1779, %v1842
        %vm1859 = vcmp.gt.f32.partialorder %v1782, %v1843
        %vm1860 = vcmp.gt.f32.partialorder %v1787, %v1844
        %vm1861 = vcmp.gt.f32.partialorder %v1790, %v1845
        %vm1862 = vcmp.gt.f32.partialorder %v1795, %v1846
        %vm1863 = vcmp.gt.f32.partialorder %v1798, %v1847
        %vm1864 = vcmp.gt.f32.partialorder %v1803, %v1848
        %vm1865 = vcmp.gt.f32.partialorder %v1806, %v1849
        %vm1866 = vcmp.gt.f32.partialorder %v1811, %v1850
        %vm1867 = vcmp.gt.f32.partialorder %v1814, %v1851
        %vm1868 = vcmp.gt.f32.partialorder %v1819, %v1852
        %vm1869 = vcmp.gt.f32.partialorder %v1822, %v1853
        %vm1870 = vcmp.gt.f32.partialorder %v1827, %v1854
        %vm1871 = vcmp.gt.f32.partialorder %v1830, %v1855
        %vm1872 = vcmp.gt.f32.partialorder %v1835, %v1856
        %vm1873 = vcmp.gt.f32.partialorder %v1838, %v1857
        %v1874 = vsel %vm1858, 1, 0
        %v1875 = vsel %vm1859, 1, 0
        %v1876 = vsel %vm1860, 1, 0
        %v1877 = vsel %vm1861, 1, 0
        %v1878 = vsel %vm1862, 1, 0
        %v1879 = vsel %vm1863, 1, 0
        %v1880 = vsel %vm1864, 1, 0
        %v1881 = vsel %vm1865, 1, 0
        %v1882 = vsel %vm1866, 1, 0
        %v1883 = vsel %vm1867, 1, 0
        %v1884 = vsel %vm1868, 1, 0
        %v1885 = vsel %vm1869, 1, 0
        %v1886 = vsel %vm1870, 1, 0
        %v1887 = vsel %vm1871, 1, 0
        %v1888 = vsel %vm1872, 1, 0
        %v1889 = vsel %vm1873, 1, 0
        %v1890 = vcvt.s32.f32 %v1874
        %v1891 = vcvt.s32.f32 %v1875
        %v1892 = vcvt.s32.f32 %v1876
        %v1893 = vcvt.s32.f32 %v1877
        %v1894 = vcvt.s32.f32 %v1878
        %v1895 = vcvt.s32.f32 %v1879
        %v1896 = vcvt.s32.f32 %v1880
        %v1897 = vcvt.s32.f32 %v1881
        %v1898 = vcvt.s32.f32 %v1882
        %v1899 = vcvt.s32.f32 %v1883
        %v1900 = vcvt.s32.f32 %v1884
        %v1901 = vcvt.s32.f32 %v1885
        %v1902 = vcvt.s32.f32 %v1886
        %v1903 = vcvt.s32.f32 %v1887
        %v1904 = vcvt.s32.f32 %v1888
        %v1905 = vcvt.s32.f32 %v1889
        %v1906 = vpack.c.bf16 %v1891, %v1890
        %v1907 = vpack.c.bf16 %v1893, %v1892
        %v1908 = vpack.c.bf16 %v1895, %v1894
        %v1909 = vpack.c.bf16 %v1897, %v1896
        %v1910 = vpack.c.bf16 %v1899, %v1898
        %v1911 = vpack.c.bf16 %v1901, %v1900
        %v1912 = vpack.c.bf16 %v1903, %v1902
        %v1913 = vpack.c.bf16 %v1905, %v1904
        %1914 = vmatprep.subr.bf16.mxu0 0
        %1915 = vmatpush1.bf16.msra.mxu0 %v492
        %1916 = vmatprep.subr.bf16.mxu0 0
        %1917 = vmatpush1.bf16.msra.mxu0 %v493
        %1918 = vmatprep.subr.bf16.mxu0 0
        %1919 = vmatpush1.bf16.msra.mxu0 %v494
        %1920 = vmatprep.subr.bf16.mxu0 0
        %1921 = vmatpush1.bf16.msra.mxu0 %v495
        %1922 = vmatprep.subr.bf16.mxu0 0
        %1923 = vmatpush1.bf16.msra.mxu0 %v496
        %1924 = vmatprep.subr.bf16.mxu0 0
        %1925 = vmatpush1.bf16.msra.mxu0 %v497
        %1926 = vmatprep.subr.bf16.mxu0 0
        %1927 = vmatpush1.bf16.msra.mxu0 %v498
        %1928 = vmatprep.subr.bf16.mxu0 0
        %1929 = vmatpush1.bf16.msra.mxu0 %v499
        %1930 = vmatprep.subr.bf16.mxu0 0
        %1931 = vmatpush1.bf16.msra.mxu0 0
        %1932 = vmatprep.subr.bf16.mxu0 0
        %1933 = vmatpush1.bf16.msra.mxu0 0
        %1934 = vmatprep.subr.bf16.mxu0 0
        %1935 = vmatpush1.bf16.msra.mxu0 0
        %1936 = vmatprep.subr.bf16.mxu0 0
        %1937 = vmatpush1.bf16.msra.mxu0 0
        %1938 = vmatprep.subr.bf16.mxu0 0
        %1939 = vmatpush1.bf16.msra.mxu0 0
        %1940 = vmatprep.subr.bf16.mxu0 0
        %1941 = vmatpush1.bf16.msra.mxu0 0
        %1942 = vmatprep.subr.bf16.mxu0 0
        %1943 = vmatpush1.bf16.msra.mxu0 0
        %1944 = vmatprep.subr.bf16.mxu0 0
        %1945 = vmatpush1.bf16.msra.mxu0 0
        %1946 = vmatprep.mubr.bf16.mxu0 0
        %1947 = vmatmul.mubr.bf16.gmra.mrb[0].mxu0 %v1906
        %v1948 = vpop.f32.mrb[0].mxu0
        %v1949 = vadd.f32 0.0, %v1948
        %v1950 = vpop.f32.mrb[0].mxu0
        %v1951 = vpop.f32.mrb[0].mxu0
        %v1952 = vadd.f32 0.0, %v1951
        %v1953 = vpop.f32.mrb[0].mxu0
        %1954 = vmatprep.mubr.bf16.mxu0 0
        %1955 = vmatmul.mubr.bf16.gmra.mrb[0].mxu0 %v1907
        %v1956 = vpop.f32.mrb[0].mxu0
        %v1957 = vadd.f32 0.0, %v1956
        %v1958 = vpop.f32.mrb[0].mxu0
        %v1959 = vpop.f32.mrb[0].mxu0
        %v1960 = vadd.f32 0.0, %v1959
        %v1961 = vpop.f32.mrb[0].mxu0
        %1962 = vmatprep.mubr.bf16.mxu0 0
        %1963 = vmatmul.mubr.bf16.gmra.mrb[0].mxu0 %v1908
        %v1964 = vpop.f32.mrb[0].mxu0
        %v1965 = vadd.f32 0.0, %v1964
        %v1966 = vpop.f32.mrb[0].mxu0
        %v1967 = vpop.f32.mrb[0].mxu0
        %v1968 = vadd.f32 0.0, %v1967
        %v1969 = vpop.f32.mrb[0].mxu0
        %1970 = vmatprep.mubr.bf16.mxu0 0
        %1971 = vmatmul.mubr.bf16.gmra.mrb[0].mxu0 %v1909
        %v1972 = vpop.f32.mrb[0].mxu0
        %v1973 = vadd.f32 0.0, %v1972
        %v1974 = vpop.f32.mrb[0].mxu0
        %v1975 = vpop.f32.mrb[0].mxu0
        %v1976 = vadd.f32 0.0, %v1975
        %v1977 = vpop.f32.mrb[0].mxu0
        %1978 = vmatprep.mubr.bf16.mxu0 0
        %1979 = vmatmul.mubr.bf16.gmra.mrb[0].mxu0 %v1910
        %v1980 = vpop.f32.mrb[0].mxu0
        %v1981 = vadd.f32 0.0, %v1980
        %v1982 = vpop.f32.mrb[0].mxu0
        %v1983 = vpop.f32.mrb[0].mxu0
        %v1984 = vadd.f32 0.0, %v1983
        %v1985 = vpop.f32.mrb[0].mxu0
        %1986 = vmatprep.mubr.bf16.mxu0 0
        %1987 = vmatmul.mubr.bf16.gmra.mrb[0].mxu0 %v1911
        %v1988 = vpop.f32.mrb[0].mxu0
        %v1989 = vadd.f32 0.0, %v1988
        %v1990 = vpop.f32.mrb[0].mxu0
        %v1991 = vpop.f32.mrb[0].mxu0
        %v1992 = vadd.f32 0.0, %v1991
        %v1993 = vpop.f32.mrb[0].mxu0
        %1994 = vmatprep.mubr.bf16.mxu0 0
        %1995 = vmatmul.mubr.bf16.gmra.mrb[0].mxu0 %v1912
        %v1996 = vpop.f32.mrb[0].mxu0
        %v1997 = vadd.f32 0.0, %v1996
        %v1998 = vpop.f32.mrb[0].mxu0
        %v1999 = vpop.f32.mrb[0].mxu0
        %v2000 = vadd.f32 0.0, %v1999
        %v2001 = vpop.f32.mrb[0].mxu0
        %2002 = vmatprep.mubr.bf16.mxu0 0
        %2003 = vmatmul.mubr.bf16.gmra.mrb[0].mxu0 %v1913
        %v2004 = vpop.f32.mrb[0].mxu0
        %v2005 = vadd.f32 0.0, %v2004
        %v2006 = vpop.f32.mrb[0].mxu0
        %v2007 = vpop.f32.mrb[0].mxu0
        %v2008 = vadd.f32 0.0, %v2007
        %v2009 = vpop.f32.mrb[0].mxu0
        %2010 = vdwg.mxu0
        %s2011 = scalar_lea.vmem %s353, 512 [#allocation8]
        %v2012 = vld [vmem:[%s2011] sm:$0xff]
        %v2013 = vld [vmem:[%s2011 + $0x8] sm:$0xff]
        %v2014 = vld [vmem:[%s2011 + $0x10] sm:$0xff]
        %v2015 = vld [vmem:[%s2011 + $0x18] sm:$0xff]
        %v2016 = vld [vmem:[%s2011 + $0x20] sm:$0xff]
        %v2017 = vld [vmem:[%s2011 + $0x28] sm:$0xff]
        %v2018 = vld [vmem:[%s2011 + $0x30] sm:$0xff]
        %v2019 = vld [vmem:[%s2011 + $0x38] sm:$0xff]
        %v2020 = vld [vmem:[%s2011 + $0x40] sm:$0xff]
        %v2021 = vld [vmem:[%s2011 + $0x48] sm:$0xff]
        %v2022 = vld [vmem:[%s2011 + $0x50] sm:$0xff]
        %v2023 = vld [vmem:[%s2011 + $0x58] sm:$0xff]
        %v2024 = vld [vmem:[%s2011 + $0x60] sm:$0xff]
        %v2025 = vld [vmem:[%s2011 + $0x68] sm:$0xff]
        %v2026 = vld [vmem:[%s2011 + $0x70] sm:$0xff]
        %v2027 = vld [vmem:[%s2011 + $0x78] sm:$0xff]
        %vm2028 = vcmp.gt.f32.partialorder %v1949, %v2012
        %vm2029 = vcmp.gt.f32.partialorder %v1952, %v2013
        %vm2030 = vcmp.gt.f32.partialorder %v1957, %v2014
        %vm2031 = vcmp.gt.f32.partialorder %v1960, %v2015
        %vm2032 = vcmp.gt.f32.partialorder %v1965, %v2016
        %vm2033 = vcmp.gt.f32.partialorder %v1968, %v2017
        %vm2034 = vcmp.gt.f32.partialorder %v1973, %v2018
        %vm2035 = vcmp.gt.f32.partialorder %v1976, %v2019
        %vm2036 = vcmp.gt.f32.partialorder %v1981, %v2020
        %vm2037 = vcmp.gt.f32.partialorder %v1984, %v2021
        %vm2038 = vcmp.gt.f32.partialorder %v1989, %v2022
        %vm2039 = vcmp.gt.f32.partialorder %v1992, %v2023
        %vm2040 = vcmp.gt.f32.partialorder %v1997, %v2024
        %vm2041 = vcmp.gt.f32.partialorder %v2000, %v2025
        %vm2042 = vcmp.gt.f32.partialorder %v2005, %v2026
        %vm2043 = vcmp.gt.f32.partialorder %v2008, %v2027
        %v2044 = vsel %vm2028, 1, 0
        %v2045 = vsel %vm2029, 1, 0
        %v2046 = vsel %vm2030, 1, 0
        %v2047 = vsel %vm2031, 1, 0
        %v2048 = vsel %vm2032, 1, 0
        %v2049 = vsel %vm2033, 1, 0
        %v2050 = vsel %vm2034, 1, 0
        %v2051 = vsel %vm2035, 1, 0
        %v2052 = vsel %vm2036, 1, 0
        %v2053 = vsel %vm2037, 1, 0
        %v2054 = vsel %vm2038, 1, 0
        %v2055 = vsel %vm2039, 1, 0
        %v2056 = vsel %vm2040, 1, 0
        %v2057 = vsel %vm2041, 1, 0
        %v2058 = vsel %vm2042, 1, 0
        %v2059 = vsel %vm2043, 1, 0
        %v2060 = vcvt.s32.f32 %v2044
        %v2061 = vcvt.s32.f32 %v2045
        %v2062 = vcvt.s32.f32 %v2046
        %v2063 = vcvt.s32.f32 %v2047
        %v2064 = vcvt.s32.f32 %v2048
        %v2065 = vcvt.s32.f32 %v2049
        %v2066 = vcvt.s32.f32 %v2050
        %v2067 = vcvt.s32.f32 %v2051
        %v2068 = vcvt.s32.f32 %v2052
        %v2069 = vcvt.s32.f32 %v2053
        %v2070 = vcvt.s32.f32 %v2054
        %v2071 = vcvt.s32.f32 %v2055
        %v2072 = vcvt.s32.f32 %v2056
        %v2073 = vcvt.s32.f32 %v2057
        %v2074 = vcvt.s32.f32 %v2058
        %v2075 = vcvt.s32.f32 %v2059
        %v2076 = vpack.c.bf16 %v2061, %v2060
        %v2077 = vpack.c.bf16 %v2063, %v2062
        %v2078 = vpack.c.bf16 %v2065, %v2064
        %v2079 = vpack.c.bf16 %v2067, %v2066
        %v2080 = vpack.c.bf16 %v2069, %v2068
        %v2081 = vpack.c.bf16 %v2071, %v2070
        %v2082 = vpack.c.bf16 %v2073, %v2072
        %v2083 = vpack.c.bf16 %v2075, %v2074
        %2084 = vmatprep.subr.bf16.mxu0 0
        %2085 = vmatpush1.bf16.msra.mxu0 %v709
        %2086 = vmatprep.subr.bf16.mxu0 0
        %2087 = vmatpush1.bf16.msra.mxu0 %v710
        %2088 = vmatprep.subr.bf16.mxu0 0
        %2089 = vmatpush1.bf16.msra.mxu0 %v711
        %2090 = vmatprep.subr.bf16.mxu0 0
        %2091 = vmatpush1.bf16.msra.mxu0 %v712
        %2092 = vmatprep.subr.bf16.mxu0 0
        %2093 = vmatpush1.bf16.msra.mxu0 %v713
        %2094 = vmatprep.subr.bf16.mxu0 0
        %2095 = vmatpush1.bf16.msra.mxu0 %v714
        %2096 = vmatprep.subr.bf16.mxu0 0
        %2097 = vmatpush1.bf16.msra.mxu0 %v715
        %2098 = vmatprep.subr.bf16.mxu0 0
        %2099 = vmatpush1.bf16.msra.mxu0 %v716
        %2100 = vmatprep.subr.bf16.mxu0 0
        %2101 = vmatpush1.bf16.msra.mxu0 0
        %2102 = vmatprep.subr.bf16.mxu0 0
        %2103 = vmatpush1.bf16.msra.mxu0 0
        %2104 = vmatprep.subr.bf16.mxu0 0
        %2105 = vmatpush1.bf16.msra.mxu0 0
        %2106 = vmatprep.subr.bf16.mxu0 0
        %2107 = vmatpush1.bf16.msra.mxu0 0
        %2108 = vmatprep.subr.bf16.mxu0 0
        %2109 = vmatpush1.bf16.msra.mxu0 0
        %2110 = vmatprep.subr.bf16.mxu0 0
        %2111 = vmatpush1.bf16.msra.mxu0 0
        %2112 = vmatprep.subr.bf16.mxu0 0
        %2113 = vmatpush1.bf16.msra.mxu0 0
        %2114 = vmatprep.subr.bf16.mxu0 0
        %2115 = vmatpush1.bf16.msra.mxu0 0
        %2116 = vmatprep.mubr.bf16.mxu0 0
        %2117 = vmatmul.mubr.bf16.gmra.mrb[0].mxu0 %v2076
        %v2118 = vpop.f32.mrb[0].mxu0
        %v2119 = vadd.f32 0.0, %v2118
        %v2120 = vpop.f32.mrb[0].mxu0
        %v2121 = vpop.f32.mrb[0].mxu0
        %v2122 = vadd.f32 0.0, %v2121
        %v2123 = vpop.f32.mrb[0].mxu0
        %2124 = vmatprep.mubr.bf16.mxu0 0
        %2125 = vmatmul.mubr.bf16.gmra.mrb[0].mxu0 %v2077
        %v2126 = vpop.f32.mrb[0].mxu0
        %v2127 = vadd.f32 0.0, %v2126
        %v2128 = vpop.f32.mrb[0].mxu0
        %v2129 = vpop.f32.mrb[0].mxu0
        %v2130 = vadd.f32 0.0, %v2129
        %v2131 = vpop.f32.mrb[0].mxu0
        %2132 = vmatprep.mubr.bf16.mxu0 0
        %2133 = vmatmul.mubr.bf16.gmra.mrb[0].mxu0 %v2078
        %v2134 = vpop.f32.mrb[0].mxu0
        %v2135 = vadd.f32 0.0, %v2134
        %v2136 = vpop.f32.mrb[0].mxu0
        %v2137 = vpop.f32.mrb[0].mxu0
        %v2138 = vadd.f32 0.0, %v2137
        %v2139 = vpop.f32.mrb[0].mxu0
        %2140 = vmatprep.mubr.bf16.mxu0 0
        %2141 = vmatmul.mubr.bf16.gmra.mrb[0].mxu0 %v2079
        %v2142 = vpop.f32.mrb[0].mxu0
        %v2143 = vadd.f32 0.0, %v2142
        %v2144 = vpop.f32.mrb[0].mxu0
        %v2145 = vpop.f32.mrb[0].mxu0
        %v2146 = vadd.f32 0.0, %v2145
        %v2147 = vpop.f32.mrb[0].mxu0
        %2148 = vmatprep.mubr.bf16.mxu0 0
        %2149 = vmatmul.mubr.bf16.gmra.mrb[0].mxu0 %v2080
        %v2150 = vpop.f32.mrb[0].mxu0
        %v2151 = vadd.f32 0.0, %v2150
        %v2152 = vpop.f32.mrb[0].mxu0
        %v2153 = vpop.f32.mrb[0].mxu0
        %v2154 = vadd.f32 0.0, %v2153
        %v2155 = vpop.f32.mrb[0].mxu0
        %2156 = vmatprep.mubr.bf16.mxu0 0
        %2157 = vmatmul.mubr.bf16.gmra.mrb[0].mxu0 %v2081
        %v2158 = vpop.f32.mrb[0].mxu0
        %v2159 = vadd.f32 0.0, %v2158
        %v2160 = vpop.f32.mrb[0].mxu0
        %v2161 = vpop.f32.mrb[0].mxu0
        %v2162 = vadd.f32 0.0, %v2161
        %v2163 = vpop.f32.mrb[0].mxu0
        %2164 = vmatprep.mubr.bf16.mxu0 0
        %2165 = vmatmul.mubr.bf16.gmra.mrb[0].mxu0 %v2082
        %v2166 = vpop.f32.mrb[0].mxu0
        %v2167 = vadd.f32 0.0, %v2166
        %v2168 = vpop.f32.mrb[0].mxu0
        %v2169 = vpop.f32.mrb[0].mxu0
        %v2170 = vadd.f32 0.0, %v2169
        %v2171 = vpop.f32.mrb[0].mxu0
        %2172 = vmatprep.mubr.bf16.mxu0 0
        %2173 = vmatmul.mubr.bf16.gmra.mrb[0].mxu0 %v2083
        %v2174 = vpop.f32.mrb[0].mxu0
        %v2175 = vadd.f32 0.0, %v2174
        %v2176 = vpop.f32.mrb[0].mxu0
        %v2177 = vpop.f32.mrb[0].mxu0
        %v2178 = vadd.f32 0.0, %v2177
        %v2179 = vpop.f32.mrb[0].mxu0
        %2180 = vdwg.mxu0
        %s2181 = scalar_lea.vmem %s362, 512 [#allocation10]
        %v2182 = vld [vmem:[%s2181] sm:$0xff]
        %v2183 = vld [vmem:[%s2181 + $0x8] sm:$0xff]
        %v2184 = vld [vmem:[%s2181 + $0x10] sm:$0xff]
        %v2185 = vld [vmem:[%s2181 + $0x18] sm:$0xff]
        %v2186 = vld [vmem:[%s2181 + $0x20] sm:$0xff]
        %v2187 = vld [vmem:[%s2181 + $0x28] sm:$0xff]
        %v2188 = vld [vmem:[%s2181 + $0x30] sm:$0xff]
        %v2189 = vld [vmem:[%s2181 + $0x38] sm:$0xff]
        %v2190 = vld [vmem:[%s2181 + $0x40] sm:$0xff]
        %v2191 = vld [vmem:[%s2181 + $0x48] sm:$0xff]
        %v2192 = vld [vmem:[%s2181 + $0x50] sm:$0xff]
        %v2193 = vld [vmem:[%s2181 + $0x58] sm:$0xff]
        %v2194 = vld [vmem:[%s2181 + $0x60] sm:$0xff]
        %v2195 = vld [vmem:[%s2181 + $0x68] sm:$0xff]
        %v2196 = vld [vmem:[%s2181 + $0x70] sm:$0xff]
        %v2197 = vld [vmem:[%s2181 + $0x78] sm:$0xff]
        %vm2198 = vcmp.gt.f32.partialorder %v2119, %v2182
        %vm2199 = vcmp.gt.f32.partialorder %v2122, %v2183
        %vm2200 = vcmp.gt.f32.partialorder %v2127, %v2184
        %vm2201 = vcmp.gt.f32.partialorder %v2130, %v2185
        %vm2202 = vcmp.gt.f32.partialorder %v2135, %v2186
        %vm2203 = vcmp.gt.f32.partialorder %v2138, %v2187
        %vm2204 = vcmp.gt.f32.partialorder %v2143, %v2188
        %vm2205 = vcmp.gt.f32.partialorder %v2146, %v2189
        %vm2206 = vcmp.gt.f32.partialorder %v2151, %v2190
        %vm2207 = vcmp.gt.f32.partialorder %v2154, %v2191
        %vm2208 = vcmp.gt.f32.partialorder %v2159, %v2192
        %vm2209 = vcmp.gt.f32.partialorder %v2162, %v2193
        %vm2210 = vcmp.gt.f32.partialorder %v2167, %v2194
        %vm2211 = vcmp.gt.f32.partialorder %v2170, %v2195
        %vm2212 = vcmp.gt.f32.partialorder %v2175, %v2196
        %vm2213 = vcmp.gt.f32.partialorder %v2178, %v2197
        %v2214 = vsel %vm2198, 1, 0
        %v2215 = vsel %vm2199, 1, 0
        %v2216 = vsel %vm2200, 1, 0
        %v2217 = vsel %vm2201, 1, 0
        %v2218 = vsel %vm2202, 1, 0
        %v2219 = vsel %vm2203, 1, 0
        %v2220 = vsel %vm2204, 1, 0
        %v2221 = vsel %vm2205, 1, 0
        %v2222 = vsel %vm2206, 1, 0
        %v2223 = vsel %vm2207, 1, 0
        %v2224 = vsel %vm2208, 1, 0
        %v2225 = vsel %vm2209, 1, 0
        %v2226 = vsel %vm2210, 1, 0
        %v2227 = vsel %vm2211, 1, 0
        %v2228 = vsel %vm2212, 1, 0
        %v2229 = vsel %vm2213, 1, 0
        %v2230 = vcvt.s32.f32 %v2214
        %v2231 = vcvt.s32.f32 %v2215
        %v2232 = vcvt.s32.f32 %v2216
        %v2233 = vcvt.s32.f32 %v2217
        %v2234 = vcvt.s32.f32 %v2218
        %v2235 = vcvt.s32.f32 %v2219
        %v2236 = vcvt.s32.f32 %v2220
        %v2237 = vcvt.s32.f32 %v2221
        %v2238 = vcvt.s32.f32 %v2222
        %v2239 = vcvt.s32.f32 %v2223
        %v2240 = vcvt.s32.f32 %v2224
        %v2241 = vcvt.s32.f32 %v2225
        %v2242 = vcvt.s32.f32 %v2226
        %v2243 = vcvt.s32.f32 %v2227
        %v2244 = vcvt.s32.f32 %v2228
        %v2245 = vcvt.s32.f32 %v2229
        %v2246 = vpack.c.bf16 %v2231, %v2230
        %v2247 = vpack.c.bf16 %v2233, %v2232
        %v2248 = vpack.c.bf16 %v2235, %v2234
        %v2249 = vpack.c.bf16 %v2237, %v2236
        %v2250 = vpack.c.bf16 %v2239, %v2238
        %v2251 = vpack.c.bf16 %v2241, %v2240
        %v2252 = vpack.c.bf16 %v2243, %v2242
        %v2253 = vpack.c.bf16 %v2245, %v2244
        %v2254 = vunpack.c.l.bf16 %v2246
        %v2255 = vunpack.c.h.bf16 %v2246
        %v2256 = vunpack.c.l.bf16 %v2247
        %v2257 = vunpack.c.h.bf16 %v2247
        %v2258 = vunpack.c.l.bf16 %v2248
        %v2259 = vunpack.c.h.bf16 %v2248
        %v2260 = vunpack.c.l.bf16 %v2249
        %v2261 = vunpack.c.h.bf16 %v2249
        %v2262 = vunpack.c.l.bf16 %v2250
        %v2263 = vunpack.c.h.bf16 %v2250
        %v2264 = vunpack.c.l.bf16 %v2251
        %v2265 = vunpack.c.h.bf16 %v2251
        %v2266 = vunpack.c.l.bf16 %v2252
        %v2267 = vunpack.c.h.bf16 %v2252
        %v2268 = vunpack.c.l.bf16 %v2253
        %v2269 = vunpack.c.h.bf16 %v2253
        %2270 = vst [vmem:[%s398] sm:$0xff] %v2254
        %2271 = vst [vmem:[%s398 + $0x8] sm:$0xff] %v2255
        %2272 = vst [vmem:[%s398 + $0x10] sm:$0xff] %v2256
        %2273 = vst [vmem:[%s398 + $0x18] sm:$0xff] %v2257
        %2274 = vst [vmem:[%s398 + $0x20] sm:$0xff] %v2258
        %2275 = vst [vmem:[%s398 + $0x28] sm:$0xff] %v2259
        %2276 = vst [vmem:[%s398 + $0x30] sm:$0xff] %v2260
        %2277 = vst [vmem:[%s398 + $0x38] sm:$0xff] %v2261
        %2278 = vst [vmem:[%s398 + $0x40] sm:$0xff] %v2262
        %2279 = vst [vmem:[%s398 + $0x48] sm:$0xff] %v2263
        %2280 = vst [vmem:[%s398 + $0x50] sm:$0xff] %v2264
        %2281 = vst [vmem:[%s398 + $0x58] sm:$0xff] %v2265
        %2282 = vst [vmem:[%s398 + $0x60] sm:$0xff] %v2266
        %2283 = vst [vmem:[%s398 + $0x68] sm:$0xff] %v2267
        %2284 = vst [vmem:[%s398 + $0x70] sm:$0xff] %v2268
        %2285 = vst [vmem:[%s398 + $0x78] sm:$0xff] %v2269
        %s2286 = sand.u32 %s154, 1
        %s2287 = scalar_lea.sflag [#allocation4], %s2286
        %s2288 = sand.u32 %s154, 1
        %s2289 = smul.addr %s2288, 128
        %s2290 = scalar_lea.vmem [#allocation11], %s2289
        // Predicated region
        $region61: #{rbm_forward.1} parent=39 // pred_check
          %p2291 = pneg %p164
        $region62: #{rbm_forward.1} parent=39 // pred_check_branch
          %2293 = sbr.rel (%p2291) target = $region64
        $region63: #{rbm_forward.1} parent=39 // pred_region
          %s2294 = smul.u32 16, %s26
          %s2296 = ssub.s32 2048, 2048
          %2297 = vsyncadd %s2287, %s2296
          %s2298 = smul.addr %s2294, 128
          %s2299 = scalar_lea.hbm %s5, %s2298
          %s2300 = sshll.u32 %s2290, 4
          %s2301 = int_to_ptr.vmem [resolvable:$true] %s2300
          %2306 = dma.vmem_to_hbm [thread:$0]  %s2301, 2048, %s2299, %s2287, 128, 128, 8
        $region64: #{rbm_forward.1} parent=39 // pred_fallthru
          _
      $region40: #{rbm_forward.1} parent=5 // pred_fallthru
        _
      %p2307 = scmp.le.s32.totalorder 2, %s21
      // Predicated region
      $region65: #{rbm_forward.1} parent=5 // pred_check
        %p2308 = pneg %p2307
      $region66: #{rbm_forward.1} parent=5 // pred_check_branch
        %2310 = sbr.rel (%p2308) target = $region68
      $region67: #{rbm_forward.1} parent=5 // pred_region
        %s2311 = ssub.s32 %s21, 2
        // Predicated region
        $region69: #{rbm_forward.1} parent=67 // pred_check
          %p2312 = pneg %p170
        $region70: #{rbm_forward.1} parent=67 // pred_check_branch
          %2314 = sbr.rel (%p2312) target = $region72
        $region71: #{rbm_forward.1} parent=67 // pred_region
          %s2315 = sand.u32 %s155, 1
          %s2316 = scalar_lea.sflag [#allocation4], %s2315
          %s2317 = sand.u32 %s155, 1
          %s2318 = smul.addr %s2317, 128
          %s2319 = scalar_lea.vmem [#allocation11], %s2318
          %2320 = dma.done %s2316, 2048
        $region72: #{rbm_forward.1} parent=67 // pred_fallthru
          _
      $region68: #{rbm_forward.1} parent=5 // pred_fallthru
        _
    $region6: #{rbm_forward.1} parent=1 // loop_footer
      %s25 = sadd.s32 1, %s21
    $region7: #{rbm_forward.1} parent=1 // loop_footer_branch
      %20 = sbr.rel target = $region3
    $region8: #{rbm_forward.1} parent=1 // loop_exit
      _
    %2321 = vsyncpa [#allocation3], 1
    %s2322 = scalar_lea.sflag [#allocation3], 1
    %2323 = vsyncpa %s2322, 1
    %2324 = vsyncpa [#allocation6], 1
    %2325 = vsyncpa [#allocation9], 1
    %s2326 = scalar_lea.sflag [#allocation9], 1
    %2327 = vsyncpa %s2326, 1
    %2328 = vsyncpa [#allocation4], 1
    %s2329 = scalar_lea.sflag [#allocation4], 1
    %2330 = vsyncpa %s2329, 1

</llo_original>
